<compile_context>
chip_gen: v5e
topology: v5e:2x2
jax: 0.10.0
libtpu: 0.0.40
codegen_flags: <defaults>
</compile_context>

<pallas_src>
import functools

import jax
import jax.numpy as jnp
from jax import lax
from jax.experimental import pallas as pl
from jax.experimental.pallas import tpu as pltpu

_MiB = 1024 * 1024


# ----------------------------- small helpers ------------------------------

def _cdiv(a: int, b: int) -> int:
    return -(-a // b)


def _round_up(x: int, m: int) -> int:
    return ((x + m - 1) // m) * m


def _tpu_generation() -> str:
    """Best-effort device generation ('v5', 'v6', 'v7', or '')."""
    try:
        kind = jax.devices()[0].device_kind.lower()
    except Exception:
        return ""
    for gen in ("v7", "v6", "v5", "v4"):
        if gen in kind:
            return gen
    return ""


def _hw_params():
    """Returns (vmem_limit_bytes, lane_align_for_large_dims, num_tensorcores).

    Physical VMEM is 128 MiB on v5e/v6e and 64 MiB per TensorCore on v7x;
    leave headroom instead of requesting all of it.  v6e/v7x MXUs are
    2x256x256 (prefer 256-aligned K/N for large dims), v5e is 4x128x128.
    """
    gen = _tpu_generation()
    if gen == "v7":
        return 48 * _MiB, 256, 2
    if gen == "v6":
        return 100 * _MiB, 256, 1
    if gen == "v5":
        return 100 * _MiB, 128, 1
    return 48 * _MiB, 128, 1            # unknown generation: be conservative


def _lane_pad(dim: int, align_large: int) -> int:
    """Pad a lane (last-axis) dimension to 128, or to the MXU width (256 on
    v6e/v7x) once the true dimension is large enough to use it."""
    if dim >= align_large:
        return _round_up(dim, align_large)
    return _round_up(dim, 128)


def _batch_tiling(batch: int, batch_tile: int, num_cores: int):
    """Pick (batch_tile, grid_steps).  Tiles are multiples of 16 rows (bf16
    packs two rows per sublane)."""
    one_step = _round_up(batch, 16)
    if num_cores == 1:
        # Single TensorCore: extra grid steps are a serial loop (~0.35us each
        # plus DMA setup) with zero parallelism gain -> single step when the
        # whole batch fits comfortably.
        if one_step <= max(batch_tile, 512):
            return one_step, 1
        steps = _cdiv(batch, batch_tile)
        tile = _round_up(_cdiv(batch, steps), 16)
        return tile, _cdiv(batch, tile)
    # v7x: 2 TensorCores share the "parallel" batch axis -> keep the step
    # count even so neither core idles on a tail step.
    steps = max(2, 2 * _cdiv(batch, 2 * batch_tile))
    tile = _round_up(_cdiv(batch, steps), 16)
    return tile, steps


# -------------------------------- kernel ----------------------------------

def _mlp_kernel(x_ref, w1_ref, b1_ref, wh_ref, bh_ref, w2_ref, b2_ref, o_ref,
                *, extra_layers: int, activation_type: str):
    """One grid step: full MLP forward for one (lane-dense) batch tile."""
    compute_dtype = w1_ref.dtype        # bf16 operands for the MXU

    def act(h):
        if activation_type == "relu":
            return jnp.maximum(h, 0.0)
        return jnp.tanh(h)

    x = x_ref[...]                                     # (tb, Fp) bf16

    # fc1 + (dropout = identity in eval mode) + activation.  Accumulate in
    # f32, then downcast the persistent inter-layer activation to bf16 ONCE:
    # it is the longest live range in the kernel and the next matmul operand.
    h = jnp.dot(x, w1_ref[...], preferred_element_type=jnp.float32) + b1_ref[...]
    h = act(h).astype(compute_dtype)

    # Extra hidden layers share fc_hidden weights (as in the nn.Module).
    def hidden_layer(h):
        hh = jnp.dot(h, wh_ref[...],
                     preferred_element_type=jnp.float32) + bh_ref[...]
        return act(hh).astype(compute_dtype)

    if extra_layers <= 3:
        for _ in range(extra_layers):                  # small depth: unrolled
            h = hidden_layer(h)
    else:                                              # deep: bound live ranges
        h = lax.fori_loop(0, extra_layers, lambda _, hh: hidden_layer(hh), h)

    # fc2 -> logits (lane-dense store).
    o_ref[...] = (jnp.dot(h, w2_ref[...], preferred_element_type=jnp.float32)
                  + b2_ref[...]).astype(o_ref.dtype)


# ------------------------------- wrappers ----------------------------------

def prepare_params(params, n_features, hidden_size, n_classes,
                   compute_dtype=jnp.bfloat16):
    """One-time weight prep: zero-pad to lane-dense widths and cast weights to
    bf16 (biases stay f32).  Keeps all per-parameter pad/convert HBM traffic
    out of the per-call hot path."""
    _, align_large, _ = _hw_params()
    Fp = _lane_pad(n_features, align_large)
    Hp = _lane_pad(hidden_size, align_large)
    Cp = _lane_pad(n_classes, align_large)

    def pad2(a, rows, cols, dtype):
        a = jnp.asarray(a, dtype)
        return jnp.pad(a, ((0, rows - a.shape[0]), (0, cols - a.shape[1])))

    return {
        "w1": pad2(params["w1"], Fp, Hp, compute_dtype),
        "b1": pad2(params["b1"], 1, Hp, jnp.float32),
        "wh": pad2(params["wh"], Hp, Hp, compute_dtype),
        "bh": pad2(params["bh"], 1, Hp, jnp.float32),
        "w2": pad2(params["w2"], Hp, Cp, compute_dtype),
        "b2": pad2(params["b2"], 1, Cp, jnp.float32),
        "dims": (n_features, hidden_size, n_classes),
        "padded_dims": (Fp, Hp, Cp),
        "compute_dtype": compute_dtype,
    }


def feedforward_network(x, prepped, *, layers: int, activation_type: str = "relu",
                        batch_tile: int = 256, out_dtype=None):
    """Pallas implementation of FeedforwardNetwork.forward (eval mode).

    x:       [B, n_features] float32
    prepped: output of prepare_params (padded/bf16 weights)
    """
    B, F = x.shape
    F0, H0, C0 = prepped["dims"]
    assert F == F0, f"x has {F} features, params expect {F0}"
    Fp, Hp, Cp = prepped["padded_dims"]
    compute_dtype = prepped["compute_dtype"]
    extra_layers = layers - 1
    if out_dtype is None:
        out_dtype = x.dtype   # f32 logits for parity with the PyTorch module

    vmem_limit, _, num_cores = _hw_params()
    tb, steps = _batch_tiling(B, batch_tile, num_cores)
    Bp = tb * steps

    # Per-call input prep: only x is padded/cast here.
    xp = jnp.pad(x.astype(compute_dtype), ((0, Bp - B), (0, Fp - F)))

    # Advisory cost estimate for XLA's scheduler.
    flops = 2 * Bp * (Fp * Hp + extra_layers * Hp * Hp + Hp * Cp)
    transcendentals = 0 if activation_type == "relu" else Bp * Hp * layers
    bytes_accessed = int(
        xp.size * xp.dtype.itemsize
        + sum(prepped[k].size * prepped[k].dtype.itemsize
              for k in ("w1", "b1", "wh", "bh", "w2", "b2"))
        + Bp * Cp * jnp.dtype(out_dtype).itemsize)

    kernel = functools.partial(_mlp_kernel,
                               extra_layers=extra_layers,
                               activation_type=activation_type)

    def build(single_buffer_weights: bool):
        def inv(shape):
            # Grid-invariant operand (index_map constant): one buffer only.
            if single_buffer_weights:
                return pl.BlockSpec(shape, lambda i: (0, 0),
                                    pipeline_mode=pl.Buffered(1))
            return pl.BlockSpec(shape, lambda i: (0, 0))

        return pl.pallas_call(
            kernel,
            out_shape=jax.ShapeDtypeStruct((Bp, Cp), out_dtype),
            grid_spec=pltpu.PrefetchScalarGridSpec(
                num_scalar_prefetch=0,
                grid=(steps,),
                in_specs=[
                    pl.BlockSpec((tb, Fp), lambda i: (i, 0)),   # x tile
                    inv((Fp, Hp)),                              # w1
                    inv((1, Hp)),                               # b1
                    inv((Hp, Hp)),                              # w_hidden
                    inv((1, Hp)),                               # b_hidden
                    inv((Hp, Cp)),                              # w2
                    inv((1, Cp)),                               # b2
                ],
                out_specs=pl.BlockSpec((tb, Cp), lambda i: (i, 0)),
            ),
            compiler_params=pltpu.CompilerParams(
                dimension_semantics=("parallel",),
                vmem_limit_bytes=vmem_limit,
            ),
            cost_estimate=pl.CostEstimate(flops=flops,
                                          transcendentals=transcendentals,
                                          bytes_accessed=bytes_accessed),
        )

    args = (xp, prepped["w1"], prepped["b1"], prepped["wh"], prepped["bh"],
            prepped["w2"], prepped["b2"])
    try:
        out_padded = build(single_buffer_weights=True)(*args)
    except Exception:
        # Fallback: default double-buffered weights (previously verified clean).
        out_padded = build(single_buffer_weights=False)(*args)

    return out_padded[:B, :C0]


# ------------------------------ test harness -------------------------------

def init_params(key, n_features, hidden_size, n_classes, dtype=jnp.float32):
    """Deterministic synthetic parameters (shapes match the nn.Module)."""
    ks = jax.random.split(key, 6)

    def lin(kw, kb, fan_in, fan_out):
        bound = 1.0 / (fan_in ** 0.5)
        w = jax.random.uniform(kw, (fan_in, fan_out), dtype, -bound, bound)
        b = jax.random.uniform(kb, (1, fan_out), dtype, -bound, bound)
        return w, b

    w1, b1 = lin(ks[0], ks[1], n_features, hidden_size)
    wh, bh = lin(ks[2], ks[3], hidden_size, hidden_size)
    w2, b2 = lin(ks[4], ks[5], hidden_size, n_classes)
    return {"w1": w1, "b1": b1, "wh": wh, "bh": bh, "w2": w2, "b2": b2}


def _reference(x, p, layers, activation_type, compute_dtype=jnp.bfloat16):
    """Pure-JAX reference using the same bf16-operand / f32-accum arithmetic."""
    act = (lambda h: jnp.maximum(h, 0.0)) if activation_type == "relu" else jnp.tanh
    cd = compute_dtype
    h = jnp.dot(x.astype(cd), p["w1"].astype(cd),
                preferred_element_type=jnp.float32) + p["b1"]
    h = act(h).astype(cd)
    for _ in range(layers - 1):
        h = jnp.dot(h, p["wh"].astype(cd),
                    preferred_element_type=jnp.float32) + p["bh"]
        h = act(h).astype(cd)
    return jnp.dot(h, p["w2"].astype(cd),
                   preferred_element_type=jnp.float32) + p["b2"]


if __name__ == "__main__":
    # Shapes consistent with the module's forward: [batch, n_features] in,
    # [batch, n_classes] out.
    B, F, H, C, LAYERS = 256, 64, 32, 4, 3   # 2 extra hidden layers
    ACT = "relu"

    key = jax.random.PRNGKey(0)
    kx, kp = jax.random.split(key)
    x = jax.random.normal(kx, (B, F), dtype=jnp.float32)
    params = init_params(kp, F, H, C)

    # One-time weight prep (pad + bf16 cast) outside the hot path.
    prepped = prepare_params(params, F, H, C)

    out = feedforward_network(x, prepped, layers=LAYERS, activation_type=ACT,
                              batch_tile=256)
    out = jax.block_until_ready(out)

    ref = _reference(x, params, LAYERS, ACT)
    assert out.shape == (B, C)
    assert bool(jnp.allclose(out, ref, atol=1e-2, rtol=1e-2)), \
        "mismatch vs JAX reference"

    print("KERNEL_OK")
</pallas_src>

<mosaic_0001>
module attributes {stable_mosaic.version = 11 : i64} {
  func.func @_mlp_kernel(%arg0: i32, %arg1: memref<256x128xbf16, #tpu.memory_space<vmem>>, %arg2: memref<128x128xbf16, #tpu.memory_space<vmem>>, %arg3: memref<1x128xf32, #tpu.memory_space<vmem>>, %arg4: memref<128x128xbf16, #tpu.memory_space<vmem>>, %arg5: memref<1x128xf32, #tpu.memory_space<vmem>>, %arg6: memref<128x128xbf16, #tpu.memory_space<vmem>>, %arg7: memref<1x128xf32, #tpu.memory_space<vmem>>, %arg8: memref<256x128xf32, #tpu.memory_space<vmem>>) attributes {dimension_semantics = [#tpu.dimension_semantics<parallel>], iteration_bounds = array<i64: 1>, scalar_prefetch = 0 : i64, scratch_operands = 0 : i64, tpu.core_type = #tpu.core_type<tc>, window_params = [{transform_indices = @transform_0, window_bounds = array<i64: 256, 128>}, {pipeline_mode = #tpu.pipeline_mode<synchronous>, transform_indices = @transform_1, window_bounds = array<i64: 128, 128>}, {pipeline_mode = #tpu.pipeline_mode<synchronous>, transform_indices = @transform_2, window_bounds = array<i64: 1, 128>}, {pipeline_mode = #tpu.pipeline_mode<synchronous>, transform_indices = @transform_3, window_bounds = array<i64: 128, 128>}, {pipeline_mode = #tpu.pipeline_mode<synchronous>, transform_indices = @transform_4, window_bounds = array<i64: 1, 128>}, {pipeline_mode = #tpu.pipeline_mode<synchronous>, transform_indices = @transform_5, window_bounds = array<i64: 128, 128>}, {pipeline_mode = #tpu.pipeline_mode<synchronous>, transform_indices = @transform_6, window_bounds = array<i64: 1, 128>}, {transform_indices = @transform_7, window_bounds = array<i64: 256, 128>}]} {
    %c0 = arith.constant 0 : index
    %c0_0 = arith.constant 0 : index
    %0 = vector.load %arg1[%c0, %c0_0] : memref<256x128xbf16, #tpu.memory_space<vmem>>, vector<256x128xbf16>
    %c0_1 = arith.constant 0 : index
    %c0_2 = arith.constant 0 : index
    %1 = vector.load %arg2[%c0_1, %c0_2] : memref<128x128xbf16, #tpu.memory_space<vmem>>, vector<128x128xbf16>
    %cst = arith.constant dense<0.000000e+00> : vector<256x128xf32>
    %2 = tpu.matmul %0, %1, %cst {dimension_numbers = #tpu.dot_dimension_numbers<[1], [0], [0], [1], [0, 0, 1, 1], [], []>} : vector<256x128xbf16>, vector<128x128xbf16>, vector<256x128xf32> -> vector<256x128xf32>
    %c0_3 = arith.constant 0 : index
    %c0_4 = arith.constant 0 : index
    %3 = vector.load %arg3[%c0_3, %c0_4] : memref<1x128xf32, #tpu.memory_space<vmem>>, vector<1x128xf32>
    %4 = vector.broadcast %3 : vector<1x128xf32> to vector<256x128xf32>
    %5 = arith.addf %2, %4 : vector<256x128xf32>
    %cst_5 = arith.constant 0.000000e+00 : f32
    %6 = vector.broadcast %cst_5 : f32 to vector<256x128xf32>
    %7 = arith.maximumf %5, %6 : vector<256x128xf32>
    %8 = arith.truncf %7 : vector<256x128xf32> to vector<256x128xbf16>
    %c0_6 = arith.constant 0 : index
    %c0_7 = arith.constant 0 : index
    %9 = vector.load %arg4[%c0_6, %c0_7] : memref<128x128xbf16, #tpu.memory_space<vmem>>, vector<128x128xbf16>
    %cst_8 = arith.constant dense<0.000000e+00> : vector<256x128xf32>
    %10 = tpu.matmul %8, %9, %cst_8 {dimension_numbers = #tpu.dot_dimension_numbers<[1], [0], [0], [1], [0, 0, 1, 1], [], []>} : vector<256x128xbf16>, vector<128x128xbf16>, vector<256x128xf32> -> vector<256x128xf32>
    %c0_9 = arith.constant 0 : index
    %c0_10 = arith.constant 0 : index
    %11 = vector.load %arg5[%c0_9, %c0_10] : memref<1x128xf32, #tpu.memory_space<vmem>>, vector<1x128xf32>
    %12 = vector.broadcast %11 : vector<1x128xf32> to vector<256x128xf32>
    %13 = arith.addf %10, %12 : vector<256x128xf32>
    %cst_11 = arith.constant 0.000000e+00 : f32
    %14 = vector.broadcast %cst_11 : f32 to vector<256x128xf32>
    %15 = arith.maximumf %13, %14 : vector<256x128xf32>
    %16 = arith.truncf %15 : vector<256x128xf32> to vector<256x128xbf16>
    %c0_12 = arith.constant 0 : index
    %c0_13 = arith.constant 0 : index
    %17 = vector.load %arg4[%c0_12, %c0_13] : memref<128x128xbf16, #tpu.memory_space<vmem>>, vector<128x128xbf16>
    %cst_14 = arith.constant dense<0.000000e+00> : vector<256x128xf32>
    %18 = tpu.matmul %16, %17, %cst_14 {dimension_numbers = #tpu.dot_dimension_numbers<[1], [0], [0], [1], [0, 0, 1, 1], [], []>} : vector<256x128xbf16>, vector<128x128xbf16>, vector<256x128xf32> -> vector<256x128xf32>
    %c0_15 = arith.constant 0 : index
    %c0_16 = arith.constant 0 : index
    %19 = vector.load %arg5[%c0_15, %c0_16] : memref<1x128xf32, #tpu.memory_space<vmem>>, vector<1x128xf32>
    %20 = vector.broadcast %19 : vector<1x128xf32> to vector<256x128xf32>
    %21 = arith.addf %18, %20 : vector<256x128xf32>
    %cst_17 = arith.constant 0.000000e+00 : f32
    %22 = vector.broadcast %cst_17 : f32 to vector<256x128xf32>
    %23 = arith.maximumf %21, %22 : vector<256x128xf32>
    %24 = arith.truncf %23 : vector<256x128xf32> to vector<256x128xbf16>
    %c0_18 = arith.constant 0 : index
    %c0_19 = arith.constant 0 : index
    %25 = vector.load %arg6[%c0_18, %c0_19] : memref<128x128xbf16, #tpu.memory_space<vmem>>, vector<128x128xbf16>
    %cst_20 = arith.constant dense<0.000000e+00> : vector<256x128xf32>
    %26 = tpu.matmul %24, %25, %cst_20 {dimension_numbers = #tpu.dot_dimension_numbers<[1], [0], [0], [1], [0, 0, 1, 1], [], []>} : vector<256x128xbf16>, vector<128x128xbf16>, vector<256x128xf32> -> vector<256x128xf32>
    %c0_21 = arith.constant 0 : index
    %c0_22 = arith.constant 0 : index
    %27 = vector.load %arg7[%c0_21, %c0_22] : memref<1x128xf32, #tpu.memory_space<vmem>>, vector<1x128xf32>
    %28 = vector.broadcast %27 : vector<1x128xf32> to vector<256x128xf32>
    %29 = arith.addf %26, %28 : vector<256x128xf32>
    %c0_23 = arith.constant 0 : index
    %c0_24 = arith.constant 0 : index
    %30 = vector.load %arg8[%c0_23, %c0_24] : memref<256x128xf32, #tpu.memory_space<vmem>>, vector<256x128xf32>
    tpu.vector_store %arg8[%c0_23, %c0_24], %29 {strides = array<i32>} : memref<256x128xf32, #tpu.memory_space<vmem>>, vector<256x128xf32>,
    return
  }
  func.func @transform_0(%arg0: i32) -> (i32, i32) {
    %c0_i32 = arith.constant 0 : i32
    %c0_i32_0 = arith.constant 0 : i32
    return %arg0, %c0_i32 : i32, i32
  }
  func.func @transform_1(%arg0: i32) -> (i32, i32) {
    %c0_i32 = arith.constant 0 : i32
    %c0_i32_0 = arith.constant 0 : i32
    %c0_i32_1 = arith.constant 0 : i32
    return %c0_i32, %c0_i32_0 : i32, i32
  }
  func.func @transform_2(%arg0: i32) -> (i32, i32) {
    %c0_i32 = arith.constant 0 : i32
    %c0_i32_0 = arith.constant 0 : i32
    %c0_i32_1 = arith.constant 0 : i32
    return %c0_i32, %c0_i32_0 : i32, i32
  }
  func.func @transform_3(%arg0: i32) -> (i32, i32) {
    %c0_i32 = arith.constant 0 : i32
    %c0_i32_0 = arith.constant 0 : i32
    %c0_i32_1 = arith.constant 0 : i32
    return %c0_i32, %c0_i32_0 : i32, i32
  }
  func.func @transform_4(%arg0: i32) -> (i32, i32) {
    %c0_i32 = arith.constant 0 : i32
    %c0_i32_0 = arith.constant 0 : i32
    %c0_i32_1 = arith.constant 0 : i32
    return %c0_i32, %c0_i32_0 : i32, i32
  }
  func.func @transform_5(%arg0: i32) -> (i32, i32) {
    %c0_i32 = arith.constant 0 : i32
    %c0_i32_0 = arith.constant 0 : i32
    %c0_i32_1 = arith.constant 0 : i32
    return %c0_i32, %c0_i32_0 : i32, i32
  }
  func.func @transform_6(%arg0: i32) -> (i32, i32) {
    %c0_i32 = arith.constant 0 : i32
    %c0_i32_0 = arith.constant 0 : i32
    %c0_i32_1 = arith.constant 0 : i32
    return %c0_i32, %c0_i32_0 : i32, i32
  }
  func.func @transform_7(%arg0: i32) -> (i32, i32) {
    %c0_i32 = arith.constant 0 : i32
    %c0_i32_0 = arith.constant 0 : i32
    return %arg0, %c0_i32 : i32, i32
  }
}

module attributes {stable_mosaic.version = 11 : i64} {
  func.func @_mlp_kernel(%arg0: i32, %arg1: memref<256x128xbf16, #tpu.memory_space<vmem>>, %arg2: memref<128x128xbf16, #tpu.memory_space<vmem>>, %arg3: memref<1x128xf32, #tpu.memory_space<vmem>>, %arg4: memref<128x128xbf16, #tpu.memory_space<vmem>>, %arg5: memref<1x128xf32, #tpu.memory_space<vmem>>, %arg6: memref<128x128xbf16, #tpu.memory_space<vmem>>, %arg7: memref<1x128xf32, #tpu.memory_space<vmem>>, %arg8: memref<256x128xf32, #tpu.memory_space<vmem>>) attributes {dimension_semantics = [#tpu.dimension_semantics<parallel>], iteration_bounds = array<i64: 1>, scalar_prefetch = 0 : i64, scratch_operands = 0 : i64, tpu.core_type = #tpu.core_type<tc>, window_params = [{transform_indices = @transform_0, window_bounds = array<i64: 256, 128>}, {pipeline_mode = #tpu.pipeline_mode<synchronous>, transform_indices = @transform_1, window_bounds = array<i64: 128, 128>}, {pipeline_mode = #tpu.pipeline_mode<synchronous>, transform_indices = @transform_2, window_bounds = array<i64: 1, 128>}, {pipeline_mode = #tpu.pipeline_mode<synchronous>, transform_indices = @transform_3, window_bounds = array<i64: 128, 128>}, {pipeline_mode = #tpu.pipeline_mode<synchronous>, transform_indices = @transform_4, window_bounds = array<i64: 1, 128>}, {pipeline_mode = #tpu.pipeline_mode<synchronous>, transform_indices = @transform_5, window_bounds = array<i64: 128, 128>}, {pipeline_mode = #tpu.pipeline_mode<synchronous>, transform_indices = @transform_6, window_bounds = array<i64: 1, 128>}, {transform_indices = @transform_7, window_bounds = array<i64: 256, 128>}]} {
    %c0 = arith.constant 0 : index
    %c0_0 = arith.constant 0 : index
    %0 = vector.load %arg1[%c0, %c0_0] : memref<256x128xbf16, #tpu.memory_space<vmem>>, vector<256x128xbf16>
    %c0_1 = arith.constant 0 : index
    %c0_2 = arith.constant 0 : index
    %1 = vector.load %arg2[%c0_1, %c0_2] : memref<128x128xbf16, #tpu.memory_space<vmem>>, vector<128x128xbf16>
    %cst = arith.constant dense<0.000000e+00> : vector<256x128xf32>
    %2 = tpu.matmul %0, %1, %cst {dimension_numbers = #tpu.dot_dimension_numbers<[1], [0], [0], [1], [0, 0, 1, 1], [], []>} : vector<256x128xbf16>, vector<128x128xbf16>, vector<256x128xf32> -> vector<256x128xf32>
    %c0_3 = arith.constant 0 : index
    %c0_4 = arith.constant 0 : index
    %3 = vector.load %arg3[%c0_3, %c0_4] : memref<1x128xf32, #tpu.memory_space<vmem>>, vector<1x128xf32>
    %4 = vector.broadcast %3 : vector<1x128xf32> to vector<256x128xf32>
    %5 = arith.addf %2, %4 : vector<256x128xf32>
    %cst_5 = arith.constant 0.000000e+00 : f32
    %6 = vector.broadcast %cst_5 : f32 to vector<256x128xf32>
    %7 = arith.maximumf %5, %6 : vector<256x128xf32>
    %8 = arith.truncf %7 : vector<256x128xf32> to vector<256x128xbf16>
    %c0_6 = arith.constant 0 : index
    %c0_7 = arith.constant 0 : index
    %9 = vector.load %arg4[%c0_6, %c0_7] : memref<128x128xbf16, #tpu.memory_space<vmem>>, vector<128x128xbf16>
    %cst_8 = arith.constant dense<0.000000e+00> : vector<256x128xf32>
    %10 = tpu.matmul %8, %9, %cst_8 {dimension_numbers = #tpu.dot_dimension_numbers<[1], [0], [0], [1], [0, 0, 1, 1], [], []>} : vector<256x128xbf16>, vector<128x128xbf16>, vector<256x128xf32> -> vector<256x128xf32>
    %c0_9 = arith.constant 0 : index
    %c0_10 = arith.constant 0 : index
    %11 = vector.load %arg5[%c0_9, %c0_10] : memref<1x128xf32, #tpu.memory_space<vmem>>, vector<1x128xf32>
    %12 = vector.broadcast %11 : vector<1x128xf32> to vector<256x128xf32>
    %13 = arith.addf %10, %12 : vector<256x128xf32>
    %cst_11 = arith.constant 0.000000e+00 : f32
    %14 = vector.broadcast %cst_11 : f32 to vector<256x128xf32>
    %15 = arith.maximumf %13, %14 : vector<256x128xf32>
    %16 = arith.truncf %15 : vector<256x128xf32> to vector<256x128xbf16>
    %c0_12 = arith.constant 0 : index
    %c0_13 = arith.constant 0 : index
    %17 = vector.load %arg4[%c0_12, %c0_13] : memref<128x128xbf16, #tpu.memory_space<vmem>>, vector<128x128xbf16>
    %cst_14 = arith.constant dense<0.000000e+00> : vector<256x128xf32>
    %18 = tpu.matmul %16, %17, %cst_14 {dimension_numbers = #tpu.dot_dimension_numbers<[1], [0], [0], [1], [0, 0, 1, 1], [], []>} : vector<256x128xbf16>, vector<128x128xbf16>, vector<256x128xf32> -> vector<256x128xf32>
    %c0_15 = arith.constant 0 : index
    %c0_16 = arith.constant 0 : index
    %19 = vector.load %arg5[%c0_15, %c0_16] : memref<1x128xf32, #tpu.memory_space<vmem>>, vector<1x128xf32>
    %20 = vector.broadcast %19 : vector<1x128xf32> to vector<256x128xf32>
    %21 = arith.addf %18, %20 : vector<256x128xf32>
    %cst_17 = arith.constant 0.000000e+00 : f32
    %22 = vector.broadcast %cst_17 : f32 to vector<256x128xf32>
    %23 = arith.maximumf %21, %22 : vector<256x128xf32>
    %24 = arith.truncf %23 : vector<256x128xf32> to vector<256x128xbf16>
    %c0_18 = arith.constant 0 : index
    %c0_19 = arith.constant 0 : index
    %25 = vector.load %arg6[%c0_18, %c0_19] : memref<128x128xbf16, #tpu.memory_space<vmem>>, vector<128x128xbf16>
    %cst_20 = arith.constant dense<0.000000e+00> : vector<256x128xf32>
    %26 = tpu.matmul %24, %25, %cst_20 {dimension_numbers = #tpu.dot_dimension_numbers<[1], [0], [0], [1], [0, 0, 1, 1], [], []>} : vector<256x128xbf16>, vector<128x128xbf16>, vector<256x128xf32> -> vector<256x128xf32>
    %c0_21 = arith.constant 0 : index
    %c0_22 = arith.constant 0 : index
    %27 = vector.load %arg7[%c0_21, %c0_22] : memref<1x128xf32, #tpu.memory_space<vmem>>, vector<1x128xf32>
    %28 = vector.broadcast %27 : vector<1x128xf32> to vector<256x128xf32>
    %29 = arith.addf %26, %28 : vector<256x128xf32>
    %c0_23 = arith.constant 0 : index
    %c0_24 = arith.constant 0 : index
    %30 = vector.load %arg8[%c0_23, %c0_24] : memref<256x128xf32, #tpu.memory_space<vmem>>, vector<256x128xf32>
    tpu.vector_store %arg8[%c0_23, %c0_24], %29 {strides = array<i32>} : memref<256x128xf32, #tpu.memory_space<vmem>>, vector<256x128xf32>,
    return
  }
  func.func @transform_0(%arg0: i32) -> (i32, i32) {
    %c0_i32 = arith.constant 0 : i32
    %c0_i32_0 = arith.constant 0 : i32
    return %arg0, %c0_i32 : i32, i32
  }
  func.func @transform_1(%arg0: i32) -> (i32, i32) {
    %c0_i32 = arith.constant 0 : i32
    %c0_i32_0 = arith.constant 0 : i32
    %c0_i32_1 = arith.constant 0 : i32
    return %c0_i32, %c0_i32_0 : i32, i32
  }
  func.func @transform_2(%arg0: i32) -> (i32, i32) {
    %c0_i32 = arith.constant 0 : i32
    %c0_i32_0 = arith.constant 0 : i32
    %c0_i32_1 = arith.constant 0 : i32
    return %c0_i32, %c0_i32_0 : i32, i32
  }
  func.func @transform_3(%arg0: i32) -> (i32, i32) {
    %c0_i32 = arith.constant 0 : i32
    %c0_i32_0 = arith.constant 0 : i32
    %c0_i32_1 = arith.constant 0 : i32
    return %c0_i32, %c0_i32_0 : i32, i32
  }
  func.func @transform_4(%arg0: i32) -> (i32, i32) {
    %c0_i32 = arith.constant 0 : i32
    %c0_i32_0 = arith.constant 0 : i32
    %c0_i32_1 = arith.constant 0 : i32
    return %c0_i32, %c0_i32_0 : i32, i32
  }
  func.func @transform_5(%arg0: i32) -> (i32, i32) {
    %c0_i32 = arith.constant 0 : i32
    %c0_i32_0 = arith.constant 0 : i32
    %c0_i32_1 = arith.constant 0 : i32
    return %c0_i32, %c0_i32_0 : i32, i32
  }
  func.func @transform_6(%arg0: i32) -> (i32, i32) {
    %c0_i32 = arith.constant 0 : i32
    %c0_i32_0 = arith.constant 0 : i32
    %c0_i32_1 = arith.constant 0 : i32
    return %c0_i32, %c0_i32_0 : i32, i32
  }
  func.func @transform_7(%arg0: i32) -> (i32, i32) {
    %c0_i32 = arith.constant 0 : i32
    %c0_i32_0 = arith.constant 0 : i32
    return %arg0, %c0_i32 : i32, i32
  }
}

</mosaic_0001>

<llo_original>
// kernel: tpu_custom_call.1
$region0: #{tpu_custom_call.1}
  #allocation0 [shape = 'u32[]', space=smem, size = 0x4, offset = 0x4, fixed_abs, tag = 'smem constant byte address 0x4 - core index']
  #allocation1 [shape = 'u32[72,128]{1,0:T(1,128)}', space=vmem, size = 0x9000, scoped, tag = 'internal scratch']
  %s0 = inlined_call_operand.hbm [shape: bf16[256,128], index: 0, kind: input, shape index: {}]
  %s1 = inlined_call_operand.hbm [shape: bf16[128,128], index: 1, kind: input, shape index: {}]
  %s2 = inlined_call_operand.vmem [shape: f32[1,128], index: 2, kind: input, shape index: {}]
  %s3 = inlined_call_operand.hbm [shape: bf16[128,128], index: 3, kind: input, shape index: {}]
  %s4 = inlined_call_operand.vmem [shape: f32[1,128], index: 4, kind: input, shape index: {}]
  %s5 = inlined_call_operand.hbm [shape: bf16[128,128], index: 5, kind: input, shape index: {}]
  %s6 = inlined_call_operand.vmem [shape: f32[1,128], index: 6, kind: input, shape index: {}]
  %s7 = inlined_call_operand.hbm [shape: f32[256,128], index: 7, kind: output, shape index: {}]
  %s8 = sld [smem:[#allocation0]]
  $region54: #{tpu_custom_call.1} parent=0
    _
  %s10 = ssub.s32 1, %s8
  %s11 = scalar_select 0, %s10, %s8
  $region1: #{tpu_custom_call.1} parent=0
    #allocation2 [shape = 'u8[65536]{0}', space=vmem, size = 0x10000, scoped, tag = 'input window, operand 0, single buffered']
    #allocation3 [shape = 's32[1]{0}', space=sflag, size = 0x4, scoped, tag = 'scoped memory for tpu_custom_call.1']
    #allocation4 [shape = 's32[1]{0}', space=sflag, size = 0x4, scoped, tag = 'scoped memory for tpu_custom_call.1']
    #allocation5 [shape = 'u8[32768]{0}', space=vmem, size = 0x8000, scoped, tag = 'input window, operand 1, single buffered']
    #allocation6 [shape = 's32[1]{0}', space=sflag, size = 0x4, scoped, tag = 'scoped memory for tpu_custom_call.1']
    #allocation7 [shape = 'u8[32768]{0}', space=vmem, size = 0x8000, scoped, tag = 'input window, operand 3, single buffered']
    #allocation8 [shape = 'u8[32768]{0}', space=vmem, size = 0x8000, scoped, tag = 'input window, operand 5, single buffered']
    #allocation9 [shape = 's32[1]{0}', space=sflag, size = 0x4, scoped, tag = 'scoped memory for tpu_custom_call.1']
    #allocation10 [shape = 'u8[131072]{0}', space=vmem, size = 0x20000, scoped, tag = 'output window, operand 0, single buffered']
    %12 = vsyncpa [#allocation3], 0
    %13 = vsyncpa [#allocation6], 0
    %14 = vsyncpa [#allocation9], 0
    %15 = vsyncpa [#allocation4], 0
    // Predicated region
    $region2: #{tpu_custom_call.1} parent=1 // pred_check
      _
    $region3: #{tpu_custom_call.1} parent=1 // pred_check_branch
      %17 = sbr.rel (0) target = $region5
    $region4: #{tpu_custom_call.1} parent=1 // pred_region
      %19 = vsyncadd [#allocation3], 0
      %s20 = sshll.u32 %s0, 4
      %s21 = int_to_ptr.hbm [resolvable:$true] %s20
      %s22 = sshll.u32 [#allocation2], 4
      %s23 = int_to_ptr.vmem [resolvable:$true] %s22
      %28 = dma.hbm_to_vmem [thread:$0]  %s21, 2048, %s23, [#allocation3], 64, 64, 4
    $region5: #{tpu_custom_call.1} parent=1 // pred_fallthru
      _
    // Predicated region
    $region6: #{tpu_custom_call.1} parent=1 // pred_check
      _
    $region7: #{tpu_custom_call.1} parent=1 // pred_check_branch
      %30 = sbr.rel (0) target = $region9
    $region8: #{tpu_custom_call.1} parent=1 // pred_region
      %32 = vsyncadd [#allocation6], 0
      %s33 = sshll.u32 %s1, 4
      %s34 = int_to_ptr.hbm [resolvable:$true] %s33
      %s35 = sshll.u32 [#allocation5], 4
      %s36 = int_to_ptr.vmem [resolvable:$true] %s35
      %41 = dma.hbm_to_vmem [thread:$0]  %s34, 1024, %s36, [#allocation6], 64, 64, 4
    $region9: #{tpu_custom_call.1} parent=1 // pred_fallthru
      _
    // Predicated region
    $region10: #{tpu_custom_call.1} parent=1 // pred_check
      _
    $region11: #{tpu_custom_call.1} parent=1 // pred_check_branch
      %43 = sbr.rel (0) target = $region13
    $region12: #{tpu_custom_call.1} parent=1 // pred_region
      _
    $region13: #{tpu_custom_call.1} parent=1 // pred_fallthru
      _
    // Predicated region
    $region14: #{tpu_custom_call.1} parent=1 // pred_check
      _
    $region15: #{tpu_custom_call.1} parent=1 // pred_check_branch
      %45 = sbr.rel (0) target = $region17
    $region16: #{tpu_custom_call.1} parent=1 // pred_region
      %47 = vsyncadd [#allocation6], 0
      %s48 = sshll.u32 %s3, 4
      %s49 = int_to_ptr.hbm [resolvable:$true] %s48
      %s50 = sshll.u32 [#allocation7], 4
      %s51 = int_to_ptr.vmem [resolvable:$true] %s50
      %56 = dma.hbm_to_vmem [thread:$0]  %s49, 1024, %s51, [#allocation6], 64, 64, 4
    $region17: #{tpu_custom_call.1} parent=1 // pred_fallthru
      _
    // Predicated region
    $region18: #{tpu_custom_call.1} parent=1 // pred_check
      _
    $region19: #{tpu_custom_call.1} parent=1 // pred_check_branch
      %58 = sbr.rel (0) target = $region21
    $region20: #{tpu_custom_call.1} parent=1 // pred_region
      _
    $region21: #{tpu_custom_call.1} parent=1 // pred_fallthru
      _
    // Predicated region
    $region22: #{tpu_custom_call.1} parent=1 // pred_check
      _
    $region23: #{tpu_custom_call.1} parent=1 // pred_check_branch
      %60 = sbr.rel (0) target = $region25
    $region24: #{tpu_custom_call.1} parent=1 // pred_region
      %62 = vsyncadd [#allocation9], 0
      %s63 = sshll.u32 %s5, 4
      %s64 = int_to_ptr.hbm [resolvable:$true] %s63
      %s65 = sshll.u32 [#allocation8], 4
      %s66 = int_to_ptr.vmem [resolvable:$true] %s65
      %71 = dma.hbm_to_vmem [thread:$0]  %s64, 1024, %s66, [#allocation9], 64, 64, 4
    $region25: #{tpu_custom_call.1} parent=1 // pred_fallthru
      _
    // Predicated region
    $region26: #{tpu_custom_call.1} parent=1 // pred_check
      _
    $region27: #{tpu_custom_call.1} parent=1 // pred_check_branch
      %73 = sbr.rel (0) target = $region29
    $region28: #{tpu_custom_call.1} parent=1 // pred_region
      _
    $region29: #{tpu_custom_call.1} parent=1 // pred_fallthru
      _
    // Predicated region
    $region30: #{tpu_custom_call.1} parent=1 // pred_check
      _
    $region31: #{tpu_custom_call.1} parent=1 // pred_check_branch
      %75 = sbr.rel (0) target = $region33
    $region32: #{tpu_custom_call.1} parent=1 // pred_region
      %77 = dma.done [#allocation3], 2048
    $region33: #{tpu_custom_call.1} parent=1 // pred_fallthru
      _
    // Predicated region
    $region34: #{tpu_custom_call.1} parent=1 // pred_check
      _
    $region35: #{tpu_custom_call.1} parent=1 // pred_check_branch
      %79 = sbr.rel (0) target = $region37
    $region36: #{tpu_custom_call.1} parent=1 // pred_region
      %81 = dma.done [#allocation6], 1024
    $region37: #{tpu_custom_call.1} parent=1 // pred_fallthru
      _
    // Predicated region
    $region38: #{tpu_custom_call.1} parent=1 // pred_check
      _
    $region39: #{tpu_custom_call.1} parent=1 // pred_check_branch
      %83 = sbr.rel (0) target = $region41
    $region40: #{tpu_custom_call.1} parent=1 // pred_region
      %85 = dma.done [#allocation6], 1024
    $region41: #{tpu_custom_call.1} parent=1 // pred_fallthru
      _
    // Predicated region
    $region42: #{tpu_custom_call.1} parent=1 // pred_check
      _
    $region43: #{tpu_custom_call.1} parent=1 // pred_check_branch
      %87 = sbr.rel (0) target = $region45
    $region44: #{tpu_custom_call.1} parent=1 // pred_region
      %89 = dma.done [#allocation9], 1024
    $region45: #{tpu_custom_call.1} parent=1 // pred_fallthru
      _
    %v90 = vld [vmem:[#allocation2] sm:$0xf]
    %v91 = vld [vmem:[#allocation2 + $0x4] sm:$0xf]
    %v92 = vld [vmem:[#allocation2 + $0x8] sm:$0xf]
    %v93 = vld [vmem:[#allocation2 + $0xc] sm:$0xf]
    %v94 = vld [vmem:[#allocation2 + $0x10] sm:$0xf]
    %v95 = vld [vmem:[#allocation2 + $0x14] sm:$0xf]
    %v96 = vld [vmem:[#allocation2 + $0x18] sm:$0xf]
    %v97 = vld [vmem:[#allocation2 + $0x1c] sm:$0xf]
    %v98 = vld [vmem:[#allocation2 + $0x20] sm:$0xf]
    %v99 = vld [vmem:[#allocation2 + $0x24] sm:$0xf]
    %v100 = vld [vmem:[#allocation2 + $0x28] sm:$0xf]
    %v101 = vld [vmem:[#allocation2 + $0x2c] sm:$0xf]
    %v102 = vld [vmem:[#allocation2 + $0x30] sm:$0xf]
    %v103 = vld [vmem:[#allocation2 + $0x34] sm:$0xf]
    %v104 = vld [vmem:[#allocation2 + $0x38] sm:$0xf]
    %v105 = vld [vmem:[#allocation2 + $0x3c] sm:$0xf]
    %v106 = vld [vmem:[#allocation2 + $0x40] sm:$0xf]
    %v107 = vld [vmem:[#allocation2 + $0x44] sm:$0xf]
    %v108 = vld [vmem:[#allocation2 + $0x48] sm:$0xf]
    %v109 = vld [vmem:[#allocation2 + $0x4c] sm:$0xf]
    %v110 = vld [vmem:[#allocation2 + $0x50] sm:$0xf]
    %v111 = vld [vmem:[#allocation2 + $0x54] sm:$0xf]
    %v112 = vld [vmem:[#allocation2 + $0x58] sm:$0xf]
    %v113 = vld [vmem:[#allocation2 + $0x5c] sm:$0xf]
    %v114 = vld [vmem:[#allocation2 + $0x60] sm:$0xf]
    %v115 = vld [vmem:[#allocation2 + $0x64] sm:$0xf]
    %v116 = vld [vmem:[#allocation2 + $0x68] sm:$0xf]
    %v117 = vld [vmem:[#allocation2 + $0x6c] sm:$0xf]
    %v118 = vld [vmem:[#allocation2 + $0x70] sm:$0xf]
    %v119 = vld [vmem:[#allocation2 + $0x74] sm:$0xf]
    %v120 = vld [vmem:[#allocation2 + $0x78] sm:$0xf]
    %v121 = vld [vmem:[#allocation2 + $0x7c] sm:$0xf]
    %v122 = vld [vmem:[#allocation5] sm:$0xf]
    %v123 = vld [vmem:[#allocation5 + $0x4] sm:$0xf]
    %v124 = vld [vmem:[#allocation5 + $0x8] sm:$0xf]
    %v125 = vld [vmem:[#allocation5 + $0xc] sm:$0xf]
    %v126 = vld [vmem:[#allocation5 + $0x10] sm:$0xf]
    %v127 = vld [vmem:[#allocation5 + $0x14] sm:$0xf]
    %v128 = vld [vmem:[#allocation5 + $0x18] sm:$0xf]
    %v129 = vld [vmem:[#allocation5 + $0x1c] sm:$0xf]
    %v130 = vld [vmem:[#allocation5 + $0x20] sm:$0xf]
    %v131 = vld [vmem:[#allocation5 + $0x24] sm:$0xf]
    %v132 = vld [vmem:[#allocation5 + $0x28] sm:$0xf]
    %v133 = vld [vmem:[#allocation5 + $0x2c] sm:$0xf]
    %v134 = vld [vmem:[#allocation5 + $0x30] sm:$0xf]
    %v135 = vld [vmem:[#allocation5 + $0x34] sm:$0xf]
    %v136 = vld [vmem:[#allocation5 + $0x38] sm:$0xf]
    %v137 = vld [vmem:[#allocation5 + $0x3c] sm:$0xf]
    %v138 = vld [vmem:[%s2] sm:$0x1]
    %v140 = vperm.slane %v138, 0
    %v174 = vunpack.c.l.b16 %v90
    %v175 = vunpack.c.l.b16 %v91
    %v176 = vunpack.c.l.b16 %v92
    %v177 = vunpack.c.l.b16 %v93
    %v178 = vunpack.c.l.b16 %v94
    %v179 = vunpack.c.l.b16 %v95
    %v180 = vunpack.c.l.b16 %v96
    %v181 = vunpack.c.l.b16 %v97
    %v182 = vunpack.c.l.b16 %v98
    %v183 = vunpack.c.l.b16 %v99
    %v184 = vunpack.c.l.b16 %v100
    %v185 = vunpack.c.l.b16 %v101
    %v186 = vunpack.c.l.b16 %v102
    %v187 = vunpack.c.l.b16 %v103
    %v188 = vunpack.c.l.b16 %v104
    %v189 = vunpack.c.l.b16 %v105
    %v190 = vunpack.c.l.b16 %v106
    %v191 = vunpack.c.l.b16 %v107
    %v192 = vunpack.c.l.b16 %v108
    %v193 = vunpack.c.l.b16 %v109
    %v194 = vunpack.c.l.b16 %v110
    %v195 = vunpack.c.l.b16 %v111
    %v196 = vunpack.c.l.b16 %v112
    %v197 = vunpack.c.l.b16 %v113
    %v198 = vunpack.c.l.b16 %v114
    %v199 = vunpack.c.l.b16 %v115
    %v200 = vunpack.c.l.b16 %v116
    %v201 = vunpack.c.l.b16 %v117
    %v202 = vunpack.c.l.b16 %v118
    %v203 = vunpack.c.l.b16 %v119
    %v204 = vunpack.c.l.b16 %v120
    %v205 = vunpack.c.l.b16 %v121
    %v206 = vpack.c.b16 %v175, %v174
    %v207 = vpack.c.b16 %v177, %v176
    %v208 = vpack.c.b16 %v179, %v178
    %v209 = vpack.c.b16 %v181, %v180
    %v210 = vpack.c.b16 %v183, %v182
    %v211 = vpack.c.b16 %v185, %v184
    %v212 = vpack.c.b16 %v187, %v186
    %v213 = vpack.c.b16 %v189, %v188
    %v214 = vpack.c.b16 %v191, %v190
    %v215 = vpack.c.b16 %v193, %v192
    %v216 = vpack.c.b16 %v195, %v194
    %v217 = vpack.c.b16 %v197, %v196
    %v218 = vpack.c.b16 %v199, %v198
    %v219 = vpack.c.b16 %v201, %v200
    %v220 = vpack.c.b16 %v203, %v202
    %v221 = vpack.c.b16 %v205, %v204
    %v254 = vunpack.c.l.b16 %v122
    %v255 = vunpack.c.l.b16 %v123
    %v256 = vunpack.c.l.b16 %v124
    %v257 = vunpack.c.l.b16 %v125
    %v258 = vunpack.c.l.b16 %v126
    %v259 = vunpack.c.l.b16 %v127
    %v260 = vunpack.c.l.b16 %v128
    %v261 = vunpack.c.l.b16 %v129
    %v262 = vunpack.c.l.b16 %v130
    %v263 = vunpack.c.l.b16 %v131
    %v264 = vunpack.c.l.b16 %v132
    %v265 = vunpack.c.l.b16 %v133
    %v266 = vunpack.c.l.b16 %v134
    %v267 = vunpack.c.l.b16 %v135
    %v268 = vunpack.c.l.b16 %v136
    %v269 = vunpack.c.l.b16 %v137
    %v270 = vpack.c.b16 %v255, %v254
    %v271 = vpack.c.b16 %v257, %v256
    %v272 = vpack.c.b16 %v259, %v258
    %v273 = vpack.c.b16 %v261, %v260
    %v274 = vpack.c.b16 %v263, %v262
    %v275 = vpack.c.b16 %v265, %v264
    %v276 = vpack.c.b16 %v267, %v266
    %v277 = vpack.c.b16 %v269, %v268
    %286 = vmatpush.bf16.msra.mxu0 %v277
    %287 = vmatpush.bf16.msra.mxu0 %v276
    %288 = vmatpush.bf16.msra.mxu0 %v275
    %289 = vmatpush.bf16.msra.mxu0 %v274
    %290 = vmatpush.bf16.msra.mxu0 %v273
    %291 = vmatpush.bf16.msra.mxu0 %v272
    %292 = vmatpush.bf16.msra.mxu0 %v271
    %293 = vmatpush.bf16.msra.mxu0 %v270
    %294 = vmatmul.bf16.gmra.mxu0 %v206
    %v295 = vpop.f32.mrf.mxu0
    %v296 = vadd.f32 %v140, %v295
    %v297 = vpop.f32.mrf.mxu0
    %v298 = vadd.f32 %v140, %v297
    %299 = vmatmul.bf16.gmra.mxu0 %v207
    %v300 = vpop.f32.mrf.mxu0
    %v301 = vadd.f32 %v140, %v300
    %v302 = vpop.f32.mrf.mxu0
    %v303 = vadd.f32 %v140, %v302
    %304 = vmatmul.bf16.gmra.mxu0 %v208
    %v305 = vpop.f32.mrf.mxu0
    %v306 = vadd.f32 %v140, %v305
    %v307 = vpop.f32.mrf.mxu0
    %v308 = vadd.f32 %v140, %v307
    %309 = vmatmul.bf16.gmra.mxu0 %v209
    %v310 = vpop.f32.mrf.mxu0
    %v311 = vadd.f32 %v140, %v310
    %v312 = vpop.f32.mrf.mxu0
    %v313 = vadd.f32 %v140, %v312
    %314 = vmatmul.bf16.gmra.mxu0 %v210
    %v315 = vpop.f32.mrf.mxu0
    %v316 = vadd.f32 %v140, %v315
    %v317 = vpop.f32.mrf.mxu0
    %v318 = vadd.f32 %v140, %v317
    %319 = vmatmul.bf16.gmra.mxu0 %v211
    %v320 = vpop.f32.mrf.mxu0
    %v321 = vadd.f32 %v140, %v320
    %v322 = vpop.f32.mrf.mxu0
    %v323 = vadd.f32 %v140, %v322
    %324 = vmatmul.bf16.gmra.mxu0 %v212
    %v325 = vpop.f32.mrf.mxu0
    %v326 = vadd.f32 %v140, %v325
    %v327 = vpop.f32.mrf.mxu0
    %v328 = vadd.f32 %v140, %v327
    %329 = vmatmul.bf16.gmra.mxu0 %v213
    %v330 = vpop.f32.mrf.mxu0
    %v331 = vadd.f32 %v140, %v330
    %v332 = vpop.f32.mrf.mxu0
    %v333 = vadd.f32 %v140, %v332
    %334 = vmatmul.bf16.gmra.mxu0 %v214
    %v335 = vpop.f32.mrf.mxu0
    %v336 = vadd.f32 %v140, %v335
    %v337 = vpop.f32.mrf.mxu0
    %v338 = vadd.f32 %v140, %v337
    %339 = vmatmul.bf16.gmra.mxu0 %v215
    %v340 = vpop.f32.mrf.mxu0
    %v341 = vadd.f32 %v140, %v340
    %v342 = vpop.f32.mrf.mxu0
    %v343 = vadd.f32 %v140, %v342
    %344 = vmatmul.bf16.gmra.mxu0 %v216
    %v345 = vpop.f32.mrf.mxu0
    %v346 = vadd.f32 %v140, %v345
    %v347 = vpop.f32.mrf.mxu0
    %v348 = vadd.f32 %v140, %v347
    %349 = vmatmul.bf16.gmra.mxu0 %v217
    %v350 = vpop.f32.mrf.mxu0
    %v351 = vadd.f32 %v140, %v350
    %v352 = vpop.f32.mrf.mxu0
    %v353 = vadd.f32 %v140, %v352
    %354 = vmatmul.bf16.gmra.mxu0 %v218
    %v355 = vpop.f32.mrf.mxu0
    %v356 = vadd.f32 %v140, %v355
    %v357 = vpop.f32.mrf.mxu0
    %v358 = vadd.f32 %v140, %v357
    %359 = vmatmul.bf16.gmra.mxu0 %v219
    %v360 = vpop.f32.mrf.mxu0
    %v361 = vadd.f32 %v140, %v360
    %v362 = vpop.f32.mrf.mxu0
    %v363 = vadd.f32 %v140, %v362
    %364 = vmatmul.bf16.gmra.mxu0 %v220
    %v365 = vpop.f32.mrf.mxu0
    %v366 = vadd.f32 %v140, %v365
    %v367 = vpop.f32.mrf.mxu0
    %v368 = vadd.f32 %v140, %v367
    %369 = vmatmul.bf16.gmra.mxu0 %v221
    %v370 = vpop.f32.mrf.mxu0
    %v371 = vadd.f32 %v140, %v370
    %v372 = vpop.f32.mrf.mxu0
    %v373 = vadd.f32 %v140, %v372
    %374 = vdwg.mxu0
    %v375 = vmax.f32 %v296, 0.0
    %v376 = vmax.f32 %v298, 0.0
    %v377 = vmax.f32 %v301, 0.0
    %v378 = vmax.f32 %v303, 0.0
    %v379 = vmax.f32 %v306, 0.0
    %v380 = vmax.f32 %v308, 0.0
    %v381 = vmax.f32 %v311, 0.0
    %v382 = vmax.f32 %v313, 0.0
    %v383 = vmax.f32 %v316, 0.0
    %v384 = vmax.f32 %v318, 0.0
    %v385 = vmax.f32 %v321, 0.0
    %v386 = vmax.f32 %v323, 0.0
    %v387 = vmax.f32 %v326, 0.0
    %v388 = vmax.f32 %v328, 0.0
    %v389 = vmax.f32 %v331, 0.0
    %v390 = vmax.f32 %v333, 0.0
    %v391 = vmax.f32 %v336, 0.0
    %v392 = vmax.f32 %v338, 0.0
    %v393 = vmax.f32 %v341, 0.0
    %v394 = vmax.f32 %v343, 0.0
    %v395 = vmax.f32 %v346, 0.0
    %v396 = vmax.f32 %v348, 0.0
    %v397 = vmax.f32 %v351, 0.0
    %v398 = vmax.f32 %v353, 0.0
    %v399 = vmax.f32 %v356, 0.0
    %v400 = vmax.f32 %v358, 0.0
    %v401 = vmax.f32 %v361, 0.0
    %v402 = vmax.f32 %v363, 0.0
    %v403 = vmax.f32 %v366, 0.0
    %v404 = vmax.f32 %v368, 0.0
    %v405 = vmax.f32 %v371, 0.0
    %v406 = vmax.f32 %v373, 0.0
    %v407 = vpack.c.bf16 %v376, %v375
    %v408 = vpack.c.bf16 %v378, %v377
    %v409 = vpack.c.bf16 %v380, %v379
    %v410 = vpack.c.bf16 %v382, %v381
    %v411 = vpack.c.bf16 %v384, %v383
    %v412 = vpack.c.bf16 %v386, %v385
    %v413 = vpack.c.bf16 %v388, %v387
    %v414 = vpack.c.bf16 %v390, %v389
    %v415 = vpack.c.bf16 %v392, %v391
    %v416 = vpack.c.bf16 %v394, %v393
    %v417 = vpack.c.bf16 %v396, %v395
    %v418 = vpack.c.bf16 %v398, %v397
    %v419 = vpack.c.bf16 %v400, %v399
    %v420 = vpack.c.bf16 %v402, %v401
    %v421 = vpack.c.bf16 %v404, %v403
    %v422 = vpack.c.bf16 %v406, %v405
    %v423 = vld [vmem:[#allocation7] sm:$0xf]
    %v424 = vld [vmem:[#allocation7 + $0x4] sm:$0xf]
    %v425 = vld [vmem:[#allocation7 + $0x8] sm:$0xf]
    %v426 = vld [vmem:[#allocation7 + $0xc] sm:$0xf]
    %v427 = vld [vmem:[#allocation7 + $0x10] sm:$0xf]
    %v428 = vld [vmem:[#allocation7 + $0x14] sm:$0xf]
    %v429 = vld [vmem:[#allocation7 + $0x18] sm:$0xf]
    %v430 = vld [vmem:[#allocation7 + $0x1c] sm:$0xf]
    %v431 = vld [vmem:[#allocation7 + $0x20] sm:$0xf]
    %v432 = vld [vmem:[#allocation7 + $0x24] sm:$0xf]
    %v433 = vld [vmem:[#allocation7 + $0x28] sm:$0xf]
    %v434 = vld [vmem:[#allocation7 + $0x2c] sm:$0xf]
    %v435 = vld [vmem:[#allocation7 + $0x30] sm:$0xf]
    %v436 = vld [vmem:[#allocation7 + $0x34] sm:$0xf]
    %v437 = vld [vmem:[#allocation7 + $0x38] sm:$0xf]
    %v438 = vld [vmem:[#allocation7 + $0x3c] sm:$0xf]
    %v439 = vld [vmem:[%s4] sm:$0x1]
    %v441 = vperm.slane %v439, 0
    %v459 = vunpack.c.l.b16 %v423
    %v460 = vunpack.c.l.b16 %v424
    %v461 = vunpack.c.l.b16 %v425
    %v462 = vunpack.c.l.b16 %v426
    %v463 = vunpack.c.l.b16 %v427
    %v464 = vunpack.c.l.b16 %v428
    %v465 = vunpack.c.l.b16 %v429
    %v466 = vunpack.c.l.b16 %v430
    %v467 = vunpack.c.l.b16 %v431
    %v468 = vunpack.c.l.b16 %v432
    %v469 = vunpack.c.l.b16 %v433
    %v470 = vunpack.c.l.b16 %v434
    %v471 = vunpack.c.l.b16 %v435
    %v472 = vunpack.c.l.b16 %v436
    %v473 = vunpack.c.l.b16 %v437
    %v474 = vunpack.c.l.b16 %v438
    %v475 = vpack.c.b16 %v460, %v459
    %v476 = vpack.c.b16 %v462, %v461
    %v477 = vpack.c.b16 %v464, %v463
    %v478 = vpack.c.b16 %v466, %v465
    %v479 = vpack.c.b16 %v468, %v467
    %v480 = vpack.c.b16 %v470, %v469
    %v481 = vpack.c.b16 %v472, %v471
    %v482 = vpack.c.b16 %v474, %v473
    %491 = vmatpush.bf16.msra.mxu0 %v482
    %492 = vmatpush.bf16.msra.mxu0 %v481
    %493 = vmatpush.bf16.msra.mxu0 %v480
    %494 = vmatpush.bf16.msra.mxu0 %v479
    %495 = vmatpush.bf16.msra.mxu0 %v478
    %496 = vmatpush.bf16.msra.mxu0 %v477
    %497 = vmatpush.bf16.msra.mxu0 %v476
    %498 = vmatpush.bf16.msra.mxu0 %v475
    %499 = vmatmul.bf16.gmra.mxu0 %v407
    %v500 = vpop.f32.mrf.mxu0
    %v501 = vadd.f32 %v441, %v500
    %v502 = vpop.f32.mrf.mxu0
    %v503 = vadd.f32 %v441, %v502
    %504 = vmatmul.bf16.gmra.mxu0 %v408
    %v505 = vpop.f32.mrf.mxu0
    %v506 = vadd.f32 %v441, %v505
    %v507 = vpop.f32.mrf.mxu0
    %v508 = vadd.f32 %v441, %v507
    %509 = vmatmul.bf16.gmra.mxu0 %v409
    %v510 = vpop.f32.mrf.mxu0
    %v511 = vadd.f32 %v441, %v510
    %v512 = vpop.f32.mrf.mxu0
    %v513 = vadd.f32 %v441, %v512
    %514 = vmatmul.bf16.gmra.mxu0 %v410
    %v515 = vpop.f32.mrf.mxu0
    %v516 = vadd.f32 %v441, %v515
    %v517 = vpop.f32.mrf.mxu0
    %v518 = vadd.f32 %v441, %v517
    %519 = vmatmul.bf16.gmra.mxu0 %v411
    %v520 = vpop.f32.mrf.mxu0
    %v521 = vadd.f32 %v441, %v520
    %v522 = vpop.f32.mrf.mxu0
    %v523 = vadd.f32 %v441, %v522
    %524 = vmatmul.bf16.gmra.mxu0 %v412
    %v525 = vpop.f32.mrf.mxu0
    %v526 = vadd.f32 %v441, %v525
    %v527 = vpop.f32.mrf.mxu0
    %v528 = vadd.f32 %v441, %v527
    %529 = vmatmul.bf16.gmra.mxu0 %v413
    %v530 = vpop.f32.mrf.mxu0
    %v531 = vadd.f32 %v441, %v530
    %v532 = vpop.f32.mrf.mxu0
    %v533 = vadd.f32 %v441, %v532
    %534 = vmatmul.bf16.gmra.mxu0 %v414
    %v535 = vpop.f32.mrf.mxu0
    %v536 = vadd.f32 %v441, %v535
    %v537 = vpop.f32.mrf.mxu0
    %v538 = vadd.f32 %v441, %v537
    %539 = vmatmul.bf16.gmra.mxu0 %v415
    %v540 = vpop.f32.mrf.mxu0
    %v541 = vadd.f32 %v441, %v540
    %v542 = vpop.f32.mrf.mxu0
    %v543 = vadd.f32 %v441, %v542
    %544 = vmatmul.bf16.gmra.mxu0 %v416
    %v545 = vpop.f32.mrf.mxu0
    %v546 = vadd.f32 %v441, %v545
    %v547 = vpop.f32.mrf.mxu0
    %v548 = vadd.f32 %v441, %v547
    %549 = vmatmul.bf16.gmra.mxu0 %v417
    %v550 = vpop.f32.mrf.mxu0
    %v551 = vadd.f32 %v441, %v550
    %v552 = vpop.f32.mrf.mxu0
    %v553 = vadd.f32 %v441, %v552
    %554 = vmatmul.bf16.gmra.mxu0 %v418
    %v555 = vpop.f32.mrf.mxu0
    %v556 = vadd.f32 %v441, %v555
    %v557 = vpop.f32.mrf.mxu0
    %v558 = vadd.f32 %v441, %v557
    %559 = vmatmul.bf16.gmra.mxu0 %v419
    %v560 = vpop.f32.mrf.mxu0
    %v561 = vadd.f32 %v441, %v560
    %v562 = vpop.f32.mrf.mxu0
    %v563 = vadd.f32 %v441, %v562
    %564 = vmatmul.bf16.gmra.mxu0 %v420
    %v565 = vpop.f32.mrf.mxu0
    %v566 = vadd.f32 %v441, %v565
    %v567 = vpop.f32.mrf.mxu0
    %v568 = vadd.f32 %v441, %v567
    %569 = vmatmul.bf16.gmra.mxu0 %v421
    %v570 = vpop.f32.mrf.mxu0
    %v571 = vadd.f32 %v441, %v570
    %v572 = vpop.f32.mrf.mxu0
    %v573 = vadd.f32 %v441, %v572
    %574 = vmatmul.bf16.gmra.mxu0 %v422
    %v575 = vpop.f32.mrf.mxu0
    %v576 = vadd.f32 %v441, %v575
    %v577 = vpop.f32.mrf.mxu0
    %v578 = vadd.f32 %v441, %v577
    %579 = vdwg.mxu0
    %v580 = vmax.f32 %v501, 0.0
    %v581 = vmax.f32 %v503, 0.0
    %v582 = vmax.f32 %v506, 0.0
    %v583 = vmax.f32 %v508, 0.0
    %v584 = vmax.f32 %v511, 0.0
    %v585 = vmax.f32 %v513, 0.0
    %v586 = vmax.f32 %v516, 0.0
    %v587 = vmax.f32 %v518, 0.0
    %v588 = vmax.f32 %v521, 0.0
    %v589 = vmax.f32 %v523, 0.0
    %v590 = vmax.f32 %v526, 0.0
    %v591 = vmax.f32 %v528, 0.0
    %v592 = vmax.f32 %v531, 0.0
    %v593 = vmax.f32 %v533, 0.0
    %v594 = vmax.f32 %v536, 0.0
    %v595 = vmax.f32 %v538, 0.0
    %v596 = vmax.f32 %v541, 0.0
    %v597 = vmax.f32 %v543, 0.0
    %v598 = vmax.f32 %v546, 0.0
    %v599 = vmax.f32 %v548, 0.0
    %v600 = vmax.f32 %v551, 0.0
    %v601 = vmax.f32 %v553, 0.0
    %v602 = vmax.f32 %v556, 0.0
    %v603 = vmax.f32 %v558, 0.0
    %v604 = vmax.f32 %v561, 0.0
    %v605 = vmax.f32 %v563, 0.0
    %v606 = vmax.f32 %v566, 0.0
    %v607 = vmax.f32 %v568, 0.0
    %v608 = vmax.f32 %v571, 0.0
    %v609 = vmax.f32 %v573, 0.0
    %v610 = vmax.f32 %v576, 0.0
    %v611 = vmax.f32 %v578, 0.0
    %v612 = vpack.c.bf16 %v581, %v580
    %v613 = vpack.c.bf16 %v583, %v582
    %v614 = vpack.c.bf16 %v585, %v584
    %v615 = vpack.c.bf16 %v587, %v586
    %v616 = vpack.c.bf16 %v589, %v588
    %v617 = vpack.c.bf16 %v591, %v590
    %v618 = vpack.c.bf16 %v593, %v592
    %v619 = vpack.c.bf16 %v595, %v594
    %v620 = vpack.c.bf16 %v597, %v596
    %v621 = vpack.c.bf16 %v599, %v598
    %v622 = vpack.c.bf16 %v601, %v600
    %v623 = vpack.c.bf16 %v603, %v602
    %v624 = vpack.c.bf16 %v605, %v604
    %v625 = vpack.c.bf16 %v607, %v606
    %v626 = vpack.c.bf16 %v609, %v608
    %v627 = vpack.c.bf16 %v611, %v610
    %628 = vmatpush.bf16.msra.mxu0 %v482
    %629 = vmatpush.bf16.msra.mxu0 %v481
    %630 = vmatpush.bf16.msra.mxu0 %v480
    %631 = vmatpush.bf16.msra.mxu0 %v479
    %632 = vmatpush.bf16.msra.mxu0 %v478
    %633 = vmatpush.bf16.msra.mxu0 %v477
    %634 = vmatpush.bf16.msra.mxu0 %v476
    %635 = vmatpush.bf16.msra.mxu0 %v475
    %636 = vmatmul.bf16.gmra.mxu0 %v612
    %v637 = vpop.f32.mrf.mxu0
    %v638 = vadd.f32 %v441, %v637
    %v639 = vpop.f32.mrf.mxu0
    %v640 = vadd.f32 %v441, %v639
    %641 = vmatmul.bf16.gmra.mxu0 %v613
    %v642 = vpop.f32.mrf.mxu0
    %v643 = vadd.f32 %v441, %v642
    %v644 = vpop.f32.mrf.mxu0
    %v645 = vadd.f32 %v441, %v644
    %646 = vmatmul.bf16.gmra.mxu0 %v614
    %v647 = vpop.f32.mrf.mxu0
    %v648 = vadd.f32 %v441, %v647
    %v649 = vpop.f32.mrf.mxu0
    %v650 = vadd.f32 %v441, %v649
    %651 = vmatmul.bf16.gmra.mxu0 %v615
    %v652 = vpop.f32.mrf.mxu0
    %v653 = vadd.f32 %v441, %v652
    %v654 = vpop.f32.mrf.mxu0
    %v655 = vadd.f32 %v441, %v654
    %656 = vmatmul.bf16.gmra.mxu0 %v616
    %v657 = vpop.f32.mrf.mxu0
    %v658 = vadd.f32 %v441, %v657
    %v659 = vpop.f32.mrf.mxu0
    %v660 = vadd.f32 %v441, %v659
    %661 = vmatmul.bf16.gmra.mxu0 %v617
    %v662 = vpop.f32.mrf.mxu0
    %v663 = vadd.f32 %v441, %v662
    %v664 = vpop.f32.mrf.mxu0
    %v665 = vadd.f32 %v441, %v664
    %666 = vmatmul.bf16.gmra.mxu0 %v618
    %v667 = vpop.f32.mrf.mxu0
    %v668 = vadd.f32 %v441, %v667
    %v669 = vpop.f32.mrf.mxu0
    %v670 = vadd.f32 %v441, %v669
    %671 = vmatmul.bf16.gmra.mxu0 %v619
    %v672 = vpop.f32.mrf.mxu0
    %v673 = vadd.f32 %v441, %v672
    %v674 = vpop.f32.mrf.mxu0
    %v675 = vadd.f32 %v441, %v674
    %676 = vmatmul.bf16.gmra.mxu0 %v620
    %v677 = vpop.f32.mrf.mxu0
    %v678 = vadd.f32 %v441, %v677
    %v679 = vpop.f32.mrf.mxu0
    %v680 = vadd.f32 %v441, %v679
    %681 = vmatmul.bf16.gmra.mxu0 %v621
    %v682 = vpop.f32.mrf.mxu0
    %v683 = vadd.f32 %v441, %v682
    %v684 = vpop.f32.mrf.mxu0
    %v685 = vadd.f32 %v441, %v684
    %686 = vmatmul.bf16.gmra.mxu0 %v622
    %v687 = vpop.f32.mrf.mxu0
    %v688 = vadd.f32 %v441, %v687
    %v689 = vpop.f32.mrf.mxu0
    %v690 = vadd.f32 %v441, %v689
    %691 = vmatmul.bf16.gmra.mxu0 %v623
    %v692 = vpop.f32.mrf.mxu0
    %v693 = vadd.f32 %v441, %v692
    %v694 = vpop.f32.mrf.mxu0
    %v695 = vadd.f32 %v441, %v694
    %696 = vmatmul.bf16.gmra.mxu0 %v624
    %v697 = vpop.f32.mrf.mxu0
    %v698 = vadd.f32 %v441, %v697
    %v699 = vpop.f32.mrf.mxu0
    %v700 = vadd.f32 %v441, %v699
    %701 = vmatmul.bf16.gmra.mxu0 %v625
    %v702 = vpop.f32.mrf.mxu0
    %v703 = vadd.f32 %v441, %v702
    %v704 = vpop.f32.mrf.mxu0
    %v705 = vadd.f32 %v441, %v704
    %706 = vmatmul.bf16.gmra.mxu0 %v626
    %v707 = vpop.f32.mrf.mxu0
    %v708 = vadd.f32 %v441, %v707
    %v709 = vpop.f32.mrf.mxu0
    %v710 = vadd.f32 %v441, %v709
    %711 = vmatmul.bf16.gmra.mxu0 %v627
    %v712 = vpop.f32.mrf.mxu0
    %v713 = vadd.f32 %v441, %v712
    %v714 = vpop.f32.mrf.mxu0
    %v715 = vadd.f32 %v441, %v714
    %716 = vdwg.mxu0
    %v717 = vmax.f32 %v638, 0.0
    %v718 = vmax.f32 %v640, 0.0
    %v719 = vmax.f32 %v643, 0.0
    %v720 = vmax.f32 %v645, 0.0
    %v721 = vmax.f32 %v648, 0.0
    %v722 = vmax.f32 %v650, 0.0
    %v723 = vmax.f32 %v653, 0.0
    %v724 = vmax.f32 %v655, 0.0
    %v725 = vmax.f32 %v658, 0.0
    %v726 = vmax.f32 %v660, 0.0
    %v727 = vmax.f32 %v663, 0.0
    %v728 = vmax.f32 %v665, 0.0
    %v729 = vmax.f32 %v668, 0.0
    %v730 = vmax.f32 %v670, 0.0
    %v731 = vmax.f32 %v673, 0.0
    %v732 = vmax.f32 %v675, 0.0
    %v733 = vmax.f32 %v678, 0.0
    %v734 = vmax.f32 %v680, 0.0
    %v735 = vmax.f32 %v683, 0.0
    %v736 = vmax.f32 %v685, 0.0
    %v737 = vmax.f32 %v688, 0.0
    %v738 = vmax.f32 %v690, 0.0
    %v739 = vmax.f32 %v693, 0.0
    %v740 = vmax.f32 %v695, 0.0
    %v741 = vmax.f32 %v698, 0.0
    %v742 = vmax.f32 %v700, 0.0
    %v743 = vmax.f32 %v703, 0.0
    %v744 = vmax.f32 %v705, 0.0
    %v745 = vmax.f32 %v708, 0.0
    %v746 = vmax.f32 %v710, 0.0
    %v747 = vmax.f32 %v713, 0.0
    %v748 = vmax.f32 %v715, 0.0
    %v749 = vpack.c.bf16 %v718, %v717
    %v750 = vpack.c.bf16 %v720, %v719
    %v751 = vpack.c.bf16 %v722, %v721
    %v752 = vpack.c.bf16 %v724, %v723
    %v753 = vpack.c.bf16 %v726, %v725
    %v754 = vpack.c.bf16 %v728, %v727
    %v755 = vpack.c.bf16 %v730, %v729
    %v756 = vpack.c.bf16 %v732, %v731
    %v757 = vpack.c.bf16 %v734, %v733
    %v758 = vpack.c.bf16 %v736, %v735
    %v759 = vpack.c.bf16 %v738, %v737
    %v760 = vpack.c.bf16 %v740, %v739
    %v761 = vpack.c.bf16 %v742, %v741
    %v762 = vpack.c.bf16 %v744, %v743
    %v763 = vpack.c.bf16 %v746, %v745
    %v764 = vpack.c.bf16 %v748, %v747
    %v765 = vld [vmem:[#allocation8] sm:$0xf]
    %v766 = vld [vmem:[#allocation8 + $0x4] sm:$0xf]
    %v767 = vld [vmem:[#allocation8 + $0x8] sm:$0xf]
    %v768 = vld [vmem:[#allocation8 + $0xc] sm:$0xf]
    %v769 = vld [vmem:[#allocation8 + $0x10] sm:$0xf]
    %v770 = vld [vmem:[#allocation8 + $0x14] sm:$0xf]
    %v771 = vld [vmem:[#allocation8 + $0x18] sm:$0xf]
    %v772 = vld [vmem:[#allocation8 + $0x1c] sm:$0xf]
    %v773 = vld [vmem:[#allocation8 + $0x20] sm:$0xf]
    %v774 = vld [vmem:[#allocation8 + $0x24] sm:$0xf]
    %v775 = vld [vmem:[#allocation8 + $0x28] sm:$0xf]
    %v776 = vld [vmem:[#allocation8 + $0x2c] sm:$0xf]
    %v777 = vld [vmem:[#allocation8 + $0x30] sm:$0xf]
    %v778 = vld [vmem:[#allocation8 + $0x34] sm:$0xf]
    %v779 = vld [vmem:[#allocation8 + $0x38] sm:$0xf]
    %v780 = vld [vmem:[#allocation8 + $0x3c] sm:$0xf]
    %v781 = vld [vmem:[%s6] sm:$0x1]
    %v783 = vperm.slane %v781, 0
    %v801 = vunpack.c.l.b16 %v765
    %v802 = vunpack.c.l.b16 %v766
    %v803 = vunpack.c.l.b16 %v767
    %v804 = vunpack.c.l.b16 %v768
    %v805 = vunpack.c.l.b16 %v769
    %v806 = vunpack.c.l.b16 %v770
    %v807 = vunpack.c.l.b16 %v771
    %v808 = vunpack.c.l.b16 %v772
    %v809 = vunpack.c.l.b16 %v773
    %v810 = vunpack.c.l.b16 %v774
    %v811 = vunpack.c.l.b16 %v775
    %v812 = vunpack.c.l.b16 %v776
    %v813 = vunpack.c.l.b16 %v777
    %v814 = vunpack.c.l.b16 %v778
    %v815 = vunpack.c.l.b16 %v779
    %v816 = vunpack.c.l.b16 %v780
    %v817 = vpack.c.b16 %v802, %v801
    %v818 = vpack.c.b16 %v804, %v803
    %v819 = vpack.c.b16 %v806, %v805
    %v820 = vpack.c.b16 %v808, %v807
    %v821 = vpack.c.b16 %v810, %v809
    %v822 = vpack.c.b16 %v812, %v811
    %v823 = vpack.c.b16 %v814, %v813
    %v824 = vpack.c.b16 %v816, %v815
    %833 = vmatpush.bf16.msra.mxu0 %v824
    %834 = vmatpush.bf16.msra.mxu0 %v823
    %835 = vmatpush.bf16.msra.mxu0 %v822
    %836 = vmatpush.bf16.msra.mxu0 %v821
    %837 = vmatpush.bf16.msra.mxu0 %v820
    %838 = vmatpush.bf16.msra.mxu0 %v819
    %839 = vmatpush.bf16.msra.mxu0 %v818
    %840 = vmatpush.bf16.msra.mxu0 %v817
    %841 = vmatmul.bf16.gmra.mxu0 %v749
    %v842 = vpop.f32.mrf.mxu0
    %v843 = vadd.f32 %v783, %v842
    %v844 = vpop.f32.mrf.mxu0
    %v845 = vadd.f32 %v783, %v844
    %846 = vmatmul.bf16.gmra.mxu0 %v750
    %v847 = vpop.f32.mrf.mxu0
    %v848 = vadd.f32 %v783, %v847
    %v849 = vpop.f32.mrf.mxu0
    %v850 = vadd.f32 %v783, %v849
    %851 = vmatmul.bf16.gmra.mxu0 %v751
    %v852 = vpop.f32.mrf.mxu0
    %v853 = vadd.f32 %v783, %v852
    %v854 = vpop.f32.mrf.mxu0
    %v855 = vadd.f32 %v783, %v854
    %856 = vmatmul.bf16.gmra.mxu0 %v752
    %v857 = vpop.f32.mrf.mxu0
    %v858 = vadd.f32 %v783, %v857
    %v859 = vpop.f32.mrf.mxu0
    %v860 = vadd.f32 %v783, %v859
    %861 = vmatmul.bf16.gmra.mxu0 %v753
    %v862 = vpop.f32.mrf.mxu0
    %v863 = vadd.f32 %v783, %v862
    %v864 = vpop.f32.mrf.mxu0
    %v865 = vadd.f32 %v783, %v864
    %866 = vmatmul.bf16.gmra.mxu0 %v754
    %v867 = vpop.f32.mrf.mxu0
    %v868 = vadd.f32 %v783, %v867
    %v869 = vpop.f32.mrf.mxu0
    %v870 = vadd.f32 %v783, %v869
    %871 = vmatmul.bf16.gmra.mxu0 %v755
    %v872 = vpop.f32.mrf.mxu0
    %v873 = vadd.f32 %v783, %v872
    %v874 = vpop.f32.mrf.mxu0
    %v875 = vadd.f32 %v783, %v874
    %876 = vmatmul.bf16.gmra.mxu0 %v756
    %v877 = vpop.f32.mrf.mxu0
    %v878 = vadd.f32 %v783, %v877
    %v879 = vpop.f32.mrf.mxu0
    %v880 = vadd.f32 %v783, %v879
    %881 = vmatmul.bf16.gmra.mxu0 %v757
    %v882 = vpop.f32.mrf.mxu0
    %v883 = vadd.f32 %v783, %v882
    %v884 = vpop.f32.mrf.mxu0
    %v885 = vadd.f32 %v783, %v884
    %886 = vmatmul.bf16.gmra.mxu0 %v758
    %v887 = vpop.f32.mrf.mxu0
    %v888 = vadd.f32 %v783, %v887
    %v889 = vpop.f32.mrf.mxu0
    %v890 = vadd.f32 %v783, %v889
    %891 = vmatmul.bf16.gmra.mxu0 %v759
    %v892 = vpop.f32.mrf.mxu0
    %v893 = vadd.f32 %v783, %v892
    %v894 = vpop.f32.mrf.mxu0
    %v895 = vadd.f32 %v783, %v894
    %896 = vmatmul.bf16.gmra.mxu0 %v760
    %v897 = vpop.f32.mrf.mxu0
    %v898 = vadd.f32 %v783, %v897
    %v899 = vpop.f32.mrf.mxu0
    %v900 = vadd.f32 %v783, %v899
    %901 = vmatmul.bf16.gmra.mxu0 %v761
    %v902 = vpop.f32.mrf.mxu0
    %v903 = vadd.f32 %v783, %v902
    %v904 = vpop.f32.mrf.mxu0
    %v905 = vadd.f32 %v783, %v904
    %906 = vmatmul.bf16.gmra.mxu0 %v762
    %v907 = vpop.f32.mrf.mxu0
    %v908 = vadd.f32 %v783, %v907
    %v909 = vpop.f32.mrf.mxu0
    %v910 = vadd.f32 %v783, %v909
    %911 = vmatmul.bf16.gmra.mxu0 %v763
    %v912 = vpop.f32.mrf.mxu0
    %v913 = vadd.f32 %v783, %v912
    %v914 = vpop.f32.mrf.mxu0
    %v915 = vadd.f32 %v783, %v914
    %916 = vmatmul.bf16.gmra.mxu0 %v764
    %v917 = vpop.f32.mrf.mxu0
    %v918 = vadd.f32 %v783, %v917
    %v919 = vpop.f32.mrf.mxu0
    %v920 = vadd.f32 %v783, %v919
    %921 = vdwg.mxu0
    %922 = vst [vmem:[#allocation10] sm:$0xff] %v843
    %923 = vst [vmem:[#allocation10 + $0x8] sm:$0xff] %v845
    %924 = vst [vmem:[#allocation10 + $0x10] sm:$0xff] %v848
    %925 = vst [vmem:[#allocation10 + $0x18] sm:$0xff] %v850
    %926 = vst [vmem:[#allocation10 + $0x20] sm:$0xff] %v853
    %927 = vst [vmem:[#allocation10 + $0x28] sm:$0xff] %v855
    %928 = vst [vmem:[#allocation10 + $0x30] sm:$0xff] %v858
    %929 = vst [vmem:[#allocation10 + $0x38] sm:$0xff] %v860
    %930 = vst [vmem:[#allocation10 + $0x40] sm:$0xff] %v863
    %931 = vst [vmem:[#allocation10 + $0x48] sm:$0xff] %v865
    %932 = vst [vmem:[#allocation10 + $0x50] sm:$0xff] %v868
    %933 = vst [vmem:[#allocation10 + $0x58] sm:$0xff] %v870
    %934 = vst [vmem:[#allocation10 + $0x60] sm:$0xff] %v873
    %935 = vst [vmem:[#allocation10 + $0x68] sm:$0xff] %v875
    %936 = vst [vmem:[#allocation10 + $0x70] sm:$0xff] %v878
    %937 = vst [vmem:[#allocation10 + $0x78] sm:$0xff] %v880
    %938 = vst [vmem:[#allocation10 + $0x80] sm:$0xff] %v883
    %939 = vst [vmem:[#allocation10 + $0x88] sm:$0xff] %v885
    %940 = vst [vmem:[#allocation10 + $0x90] sm:$0xff] %v888
    %941 = vst [vmem:[#allocation10 + $0x98] sm:$0xff] %v890
    %942 = vst [vmem:[#allocation10 + $0xa0] sm:$0xff] %v893
    %943 = vst [vmem:[#allocation10 + $0xa8] sm:$0xff] %v895
    %944 = vst [vmem:[#allocation10 + $0xb0] sm:$0xff] %v898
    %945 = vst [vmem:[#allocation10 + $0xb8] sm:$0xff] %v900
    %946 = vst [vmem:[#allocation10 + $0xc0] sm:$0xff] %v903
    %947 = vst [vmem:[#allocation10 + $0xc8] sm:$0xff] %v905
    %948 = vst [vmem:[#allocation10 + $0xd0] sm:$0xff] %v908
    %949 = vst [vmem:[#allocation10 + $0xd8] sm:$0xff] %v910
    %950 = vst [vmem:[#allocation10 + $0xe0] sm:$0xff] %v913
    %951 = vst [vmem:[#allocation10 + $0xe8] sm:$0xff] %v915
    %952 = vst [vmem:[#allocation10 + $0xf0] sm:$0xff] %v918
    %953 = vst [vmem:[#allocation10 + $0xf8] sm:$0xff] %v920
    // Predicated region
    $region46: #{tpu_custom_call.1} parent=1 // pred_check
      _
    $region47: #{tpu_custom_call.1} parent=1 // pred_check_branch
      %955 = sbr.rel (0) target = $region49
    $region48: #{tpu_custom_call.1} parent=1 // pred_region
      %957 = vsyncadd [#allocation4], 0
      %s958 = sshll.u32 [#allocation10], 4
      %s959 = int_to_ptr.vmem [resolvable:$true] %s958
      %s960 = sshll.u32 %s7, 4
      %s961 = int_to_ptr.hbm [resolvable:$true] %s960
      %966 = dma.vmem_to_hbm [thread:$0]  %s959, 4096, %s961, [#allocation4], 128, 128, 8
    $region49: #{tpu_custom_call.1} parent=1 // pred_fallthru
      _
    // Predicated region
    $region50: #{tpu_custom_call.1} parent=1 // pred_check
      _
    $region51: #{tpu_custom_call.1} parent=1 // pred_check_branch
      %968 = sbr.rel (0) target = $region53
    $region52: #{tpu_custom_call.1} parent=1 // pred_region
      %970 = dma.done [#allocation4], 4096
    $region53: #{tpu_custom_call.1} parent=1 // pred_fallthru
      _
    %971 = vsyncpa [#allocation3], 1
    %972 = vsyncpa [#allocation6], 1
    %973 = vsyncpa [#allocation9], 1
    %974 = vsyncpa [#allocation4], 1

// kernel: tpu_custom_call.1
$region0: #{tpu_custom_call.1}
  #allocation0 [shape = 'u32[]', space=smem, size = 0x4, offset = 0x4, fixed_abs, tag = 'smem constant byte address 0x4 - core index']
  #allocation1 [shape = 'u32[72,128]{1,0:T(1,128)}', space=vmem, size = 0x9000, scoped, tag = 'internal scratch']
  %s0 = inlined_call_operand.hbm [shape: bf16[256,128], index: 0, kind: input, shape index: {}]
  %s1 = inlined_call_operand.hbm [shape: bf16[128,128], index: 1, kind: input, shape index: {}]
  %s2 = inlined_call_operand.vmem [shape: f32[1,128], index: 2, kind: input, shape index: {}]
  %s3 = inlined_call_operand.hbm [shape: bf16[128,128], index: 3, kind: input, shape index: {}]
  %s4 = inlined_call_operand.vmem [shape: f32[1,128], index: 4, kind: input, shape index: {}]
  %s5 = inlined_call_operand.hbm [shape: bf16[128,128], index: 5, kind: input, shape index: {}]
  %s6 = inlined_call_operand.vmem [shape: f32[1,128], index: 6, kind: input, shape index: {}]
  %s7 = inlined_call_operand.hbm [shape: f32[256,128], index: 7, kind: output, shape index: {}]
  %s8 = sld [smem:[#allocation0]]
  $region54: #{tpu_custom_call.1} parent=0
    _
  %s10 = ssub.s32 1, %s8
  %s11 = scalar_select 0, %s10, %s8
  $region1: #{tpu_custom_call.1} parent=0
    #allocation2 [shape = 'u8[65536]{0}', space=vmem, size = 0x10000, scoped, tag = 'input window, operand 0, single buffered']
    #allocation3 [shape = 's32[1]{0}', space=sflag, size = 0x4, scoped, tag = 'scoped memory for tpu_custom_call.1']
    #allocation4 [shape = 's32[1]{0}', space=sflag, size = 0x4, scoped, tag = 'scoped memory for tpu_custom_call.1']
    #allocation5 [shape = 'u8[32768]{0}', space=vmem, size = 0x8000, scoped, tag = 'input window, operand 1, single buffered']
    #allocation6 [shape = 's32[1]{0}', space=sflag, size = 0x4, scoped, tag = 'scoped memory for tpu_custom_call.1']
    #allocation7 [shape = 'u8[32768]{0}', space=vmem, size = 0x8000, scoped, tag = 'input window, operand 3, single buffered']
    #allocation8 [shape = 'u8[32768]{0}', space=vmem, size = 0x8000, scoped, tag = 'input window, operand 5, single buffered']
    #allocation9 [shape = 's32[1]{0}', space=sflag, size = 0x4, scoped, tag = 'scoped memory for tpu_custom_call.1']
    #allocation10 [shape = 'u8[131072]{0}', space=vmem, size = 0x20000, scoped, tag = 'output window, operand 0, single buffered']
    %12 = vsyncpa [#allocation3], 0
    %13 = vsyncpa [#allocation6], 0
    %14 = vsyncpa [#allocation9], 0
    %15 = vsyncpa [#allocation4], 0
    // Predicated region
    $region2: #{tpu_custom_call.1} parent=1 // pred_check
      _
    $region3: #{tpu_custom_call.1} parent=1 // pred_check_branch
      %17 = sbr.rel (0) target = $region5
    $region4: #{tpu_custom_call.1} parent=1 // pred_region
      %19 = vsyncadd [#allocation3], 0
      %s20 = sshll.u32 %s0, 4
      %s21 = int_to_ptr.hbm [resolvable:$true] %s20
      %s22 = sshll.u32 [#allocation2], 4
      %s23 = int_to_ptr.vmem [resolvable:$true] %s22
      %28 = dma.hbm_to_vmem [thread:$0]  %s21, 2048, %s23, [#allocation3], 64, 64, 4
    $region5: #{tpu_custom_call.1} parent=1 // pred_fallthru
      _
    // Predicated region
    $region6: #{tpu_custom_call.1} parent=1 // pred_check
      _
    $region7: #{tpu_custom_call.1} parent=1 // pred_check_branch
      %30 = sbr.rel (0) target = $region9
    $region8: #{tpu_custom_call.1} parent=1 // pred_region
      %32 = vsyncadd [#allocation6], 0
      %s33 = sshll.u32 %s1, 4
      %s34 = int_to_ptr.hbm [resolvable:$true] %s33
      %s35 = sshll.u32 [#allocation5], 4
      %s36 = int_to_ptr.vmem [resolvable:$true] %s35
      %41 = dma.hbm_to_vmem [thread:$0]  %s34, 1024, %s36, [#allocation6], 64, 64, 4
    $region9: #{tpu_custom_call.1} parent=1 // pred_fallthru
      _
    // Predicated region
    $region10: #{tpu_custom_call.1} parent=1 // pred_check
      _
    $region11: #{tpu_custom_call.1} parent=1 // pred_check_branch
      %43 = sbr.rel (0) target = $region13
    $region12: #{tpu_custom_call.1} parent=1 // pred_region
      _
    $region13: #{tpu_custom_call.1} parent=1 // pred_fallthru
      _
    // Predicated region
    $region14: #{tpu_custom_call.1} parent=1 // pred_check
      _
    $region15: #{tpu_custom_call.1} parent=1 // pred_check_branch
      %45 = sbr.rel (0) target = $region17
    $region16: #{tpu_custom_call.1} parent=1 // pred_region
      %47 = vsyncadd [#allocation6], 0
      %s48 = sshll.u32 %s3, 4
      %s49 = int_to_ptr.hbm [resolvable:$true] %s48
      %s50 = sshll.u32 [#allocation7], 4
      %s51 = int_to_ptr.vmem [resolvable:$true] %s50
      %56 = dma.hbm_to_vmem [thread:$0]  %s49, 1024, %s51, [#allocation6], 64, 64, 4
    $region17: #{tpu_custom_call.1} parent=1 // pred_fallthru
      _
    // Predicated region
    $region18: #{tpu_custom_call.1} parent=1 // pred_check
      _
    $region19: #{tpu_custom_call.1} parent=1 // pred_check_branch
      %58 = sbr.rel (0) target = $region21
    $region20: #{tpu_custom_call.1} parent=1 // pred_region
      _
    $region21: #{tpu_custom_call.1} parent=1 // pred_fallthru
      _
    // Predicated region
    $region22: #{tpu_custom_call.1} parent=1 // pred_check
      _
    $region23: #{tpu_custom_call.1} parent=1 // pred_check_branch
      %60 = sbr.rel (0) target = $region25
    $region24: #{tpu_custom_call.1} parent=1 // pred_region
      %62 = vsyncadd [#allocation9], 0
      %s63 = sshll.u32 %s5, 4
      %s64 = int_to_ptr.hbm [resolvable:$true] %s63
      %s65 = sshll.u32 [#allocation8], 4
      %s66 = int_to_ptr.vmem [resolvable:$true] %s65
      %71 = dma.hbm_to_vmem [thread:$0]  %s64, 1024, %s66, [#allocation9], 64, 64, 4
    $region25: #{tpu_custom_call.1} parent=1 // pred_fallthru
      _
    // Predicated region
    $region26: #{tpu_custom_call.1} parent=1 // pred_check
      _
    $region27: #{tpu_custom_call.1} parent=1 // pred_check_branch
      %73 = sbr.rel (0) target = $region29
    $region28: #{tpu_custom_call.1} parent=1 // pred_region
      _
    $region29: #{tpu_custom_call.1} parent=1 // pred_fallthru
      _
    // Predicated region
    $region30: #{tpu_custom_call.1} parent=1 // pred_check
      _
    $region31: #{tpu_custom_call.1} parent=1 // pred_check_branch
      %75 = sbr.rel (0) target = $region33
    $region32: #{tpu_custom_call.1} parent=1 // pred_region
      %77 = dma.done [#allocation3], 2048
    $region33: #{tpu_custom_call.1} parent=1 // pred_fallthru
      _
    // Predicated region
    $region34: #{tpu_custom_call.1} parent=1 // pred_check
      _
    $region35: #{tpu_custom_call.1} parent=1 // pred_check_branch
      %79 = sbr.rel (0) target = $region37
    $region36: #{tpu_custom_call.1} parent=1 // pred_region
      %81 = dma.done [#allocation6], 1024
    $region37: #{tpu_custom_call.1} parent=1 // pred_fallthru
      _
    // Predicated region
    $region38: #{tpu_custom_call.1} parent=1 // pred_check
      _
    $region39: #{tpu_custom_call.1} parent=1 // pred_check_branch
      %83 = sbr.rel (0) target = $region41
    $region40: #{tpu_custom_call.1} parent=1 // pred_region
      %85 = dma.done [#allocation6], 1024
    $region41: #{tpu_custom_call.1} parent=1 // pred_fallthru
      _
    // Predicated region
    $region42: #{tpu_custom_call.1} parent=1 // pred_check
      _
    $region43: #{tpu_custom_call.1} parent=1 // pred_check_branch
      %87 = sbr.rel (0) target = $region45
    $region44: #{tpu_custom_call.1} parent=1 // pred_region
      %89 = dma.done [#allocation9], 1024
    $region45: #{tpu_custom_call.1} parent=1 // pred_fallthru
      _
    %v90 = vld [vmem:[#allocation2] sm:$0xf]
    %v91 = vld [vmem:[#allocation2 + $0x4] sm:$0xf]
    %v92 = vld [vmem:[#allocation2 + $0x8] sm:$0xf]
    %v93 = vld [vmem:[#allocation2 + $0xc] sm:$0xf]
    %v94 = vld [vmem:[#allocation2 + $0x10] sm:$0xf]
    %v95 = vld [vmem:[#allocation2 + $0x14] sm:$0xf]
    %v96 = vld [vmem:[#allocation2 + $0x18] sm:$0xf]
    %v97 = vld [vmem:[#allocation2 + $0x1c] sm:$0xf]
    %v98 = vld [vmem:[#allocation2 + $0x20] sm:$0xf]
    %v99 = vld [vmem:[#allocation2 + $0x24] sm:$0xf]
    %v100 = vld [vmem:[#allocation2 + $0x28] sm:$0xf]
    %v101 = vld [vmem:[#allocation2 + $0x2c] sm:$0xf]
    %v102 = vld [vmem:[#allocation2 + $0x30] sm:$0xf]
    %v103 = vld [vmem:[#allocation2 + $0x34] sm:$0xf]
    %v104 = vld [vmem:[#allocation2 + $0x38] sm:$0xf]
    %v105 = vld [vmem:[#allocation2 + $0x3c] sm:$0xf]
    %v106 = vld [vmem:[#allocation2 + $0x40] sm:$0xf]
    %v107 = vld [vmem:[#allocation2 + $0x44] sm:$0xf]
    %v108 = vld [vmem:[#allocation2 + $0x48] sm:$0xf]
    %v109 = vld [vmem:[#allocation2 + $0x4c] sm:$0xf]
    %v110 = vld [vmem:[#allocation2 + $0x50] sm:$0xf]
    %v111 = vld [vmem:[#allocation2 + $0x54] sm:$0xf]
    %v112 = vld [vmem:[#allocation2 + $0x58] sm:$0xf]
    %v113 = vld [vmem:[#allocation2 + $0x5c] sm:$0xf]
    %v114 = vld [vmem:[#allocation2 + $0x60] sm:$0xf]
    %v115 = vld [vmem:[#allocation2 + $0x64] sm:$0xf]
    %v116 = vld [vmem:[#allocation2 + $0x68] sm:$0xf]
    %v117 = vld [vmem:[#allocation2 + $0x6c] sm:$0xf]
    %v118 = vld [vmem:[#allocation2 + $0x70] sm:$0xf]
    %v119 = vld [vmem:[#allocation2 + $0x74] sm:$0xf]
    %v120 = vld [vmem:[#allocation2 + $0x78] sm:$0xf]
    %v121 = vld [vmem:[#allocation2 + $0x7c] sm:$0xf]
    %v122 = vld [vmem:[#allocation5] sm:$0xf]
    %v123 = vld [vmem:[#allocation5 + $0x4] sm:$0xf]
    %v124 = vld [vmem:[#allocation5 + $0x8] sm:$0xf]
    %v125 = vld [vmem:[#allocation5 + $0xc] sm:$0xf]
    %v126 = vld [vmem:[#allocation5 + $0x10] sm:$0xf]
    %v127 = vld [vmem:[#allocation5 + $0x14] sm:$0xf]
    %v128 = vld [vmem:[#allocation5 + $0x18] sm:$0xf]
    %v129 = vld [vmem:[#allocation5 + $0x1c] sm:$0xf]
    %v130 = vld [vmem:[#allocation5 + $0x20] sm:$0xf]
    %v131 = vld [vmem:[#allocation5 + $0x24] sm:$0xf]
    %v132 = vld [vmem:[#allocation5 + $0x28] sm:$0xf]
    %v133 = vld [vmem:[#allocation5 + $0x2c] sm:$0xf]
    %v134 = vld [vmem:[#allocation5 + $0x30] sm:$0xf]
    %v135 = vld [vmem:[#allocation5 + $0x34] sm:$0xf]
    %v136 = vld [vmem:[#allocation5 + $0x38] sm:$0xf]
    %v137 = vld [vmem:[#allocation5 + $0x3c] sm:$0xf]
    %v138 = vld [vmem:[%s2] sm:$0x1]
    %v140 = vperm.slane %v138, 0
    %v174 = vunpack.c.l.b16 %v90
    %v175 = vunpack.c.l.b16 %v91
    %v176 = vunpack.c.l.b16 %v92
    %v177 = vunpack.c.l.b16 %v93
    %v178 = vunpack.c.l.b16 %v94
    %v179 = vunpack.c.l.b16 %v95
    %v180 = vunpack.c.l.b16 %v96
    %v181 = vunpack.c.l.b16 %v97
    %v182 = vunpack.c.l.b16 %v98
    %v183 = vunpack.c.l.b16 %v99
    %v184 = vunpack.c.l.b16 %v100
    %v185 = vunpack.c.l.b16 %v101
    %v186 = vunpack.c.l.b16 %v102
    %v187 = vunpack.c.l.b16 %v103
    %v188 = vunpack.c.l.b16 %v104
    %v189 = vunpack.c.l.b16 %v105
    %v190 = vunpack.c.l.b16 %v106
    %v191 = vunpack.c.l.b16 %v107
    %v192 = vunpack.c.l.b16 %v108
    %v193 = vunpack.c.l.b16 %v109
    %v194 = vunpack.c.l.b16 %v110
    %v195 = vunpack.c.l.b16 %v111
    %v196 = vunpack.c.l.b16 %v112
    %v197 = vunpack.c.l.b16 %v113
    %v198 = vunpack.c.l.b16 %v114
    %v199 = vunpack.c.l.b16 %v115
    %v200 = vunpack.c.l.b16 %v116
    %v201 = vunpack.c.l.b16 %v117
    %v202 = vunpack.c.l.b16 %v118
    %v203 = vunpack.c.l.b16 %v119
    %v204 = vunpack.c.l.b16 %v120
    %v205 = vunpack.c.l.b16 %v121
    %v206 = vpack.c.b16 %v175, %v174
    %v207 = vpack.c.b16 %v177, %v176
    %v208 = vpack.c.b16 %v179, %v178
    %v209 = vpack.c.b16 %v181, %v180
    %v210 = vpack.c.b16 %v183, %v182
    %v211 = vpack.c.b16 %v185, %v184
    %v212 = vpack.c.b16 %v187, %v186
    %v213 = vpack.c.b16 %v189, %v188
    %v214 = vpack.c.b16 %v191, %v190
    %v215 = vpack.c.b16 %v193, %v192
    %v216 = vpack.c.b16 %v195, %v194
    %v217 = vpack.c.b16 %v197, %v196
    %v218 = vpack.c.b16 %v199, %v198
    %v219 = vpack.c.b16 %v201, %v200
    %v220 = vpack.c.b16 %v203, %v202
    %v221 = vpack.c.b16 %v205, %v204
    %v254 = vunpack.c.l.b16 %v122
    %v255 = vunpack.c.l.b16 %v123
    %v256 = vunpack.c.l.b16 %v124
    %v257 = vunpack.c.l.b16 %v125
    %v258 = vunpack.c.l.b16 %v126
    %v259 = vunpack.c.l.b16 %v127
    %v260 = vunpack.c.l.b16 %v128
    %v261 = vunpack.c.l.b16 %v129
    %v262 = vunpack.c.l.b16 %v130
    %v263 = vunpack.c.l.b16 %v131
    %v264 = vunpack.c.l.b16 %v132
    %v265 = vunpack.c.l.b16 %v133
    %v266 = vunpack.c.l.b16 %v134
    %v267 = vunpack.c.l.b16 %v135
    %v268 = vunpack.c.l.b16 %v136
    %v269 = vunpack.c.l.b16 %v137
    %v270 = vpack.c.b16 %v255, %v254
    %v271 = vpack.c.b16 %v257, %v256
    %v272 = vpack.c.b16 %v259, %v258
    %v273 = vpack.c.b16 %v261, %v260
    %v274 = vpack.c.b16 %v263, %v262
    %v275 = vpack.c.b16 %v265, %v264
    %v276 = vpack.c.b16 %v267, %v266
    %v277 = vpack.c.b16 %v269, %v268
    %286 = vmatpush.bf16.msra.mxu0 %v277
    %287 = vmatpush.bf16.msra.mxu0 %v276
    %288 = vmatpush.bf16.msra.mxu0 %v275
    %289 = vmatpush.bf16.msra.mxu0 %v274
    %290 = vmatpush.bf16.msra.mxu0 %v273
    %291 = vmatpush.bf16.msra.mxu0 %v272
    %292 = vmatpush.bf16.msra.mxu0 %v271
    %293 = vmatpush.bf16.msra.mxu0 %v270
    %294 = vmatmul.bf16.gmra.mxu0 %v206
    %v295 = vpop.f32.mrf.mxu0
    %v296 = vadd.f32 %v140, %v295
    %v297 = vpop.f32.mrf.mxu0
    %v298 = vadd.f32 %v140, %v297
    %299 = vmatmul.bf16.gmra.mxu0 %v207
    %v300 = vpop.f32.mrf.mxu0
    %v301 = vadd.f32 %v140, %v300
    %v302 = vpop.f32.mrf.mxu0
    %v303 = vadd.f32 %v140, %v302
    %304 = vmatmul.bf16.gmra.mxu0 %v208
    %v305 = vpop.f32.mrf.mxu0
    %v306 = vadd.f32 %v140, %v305
    %v307 = vpop.f32.mrf.mxu0
    %v308 = vadd.f32 %v140, %v307
    %309 = vmatmul.bf16.gmra.mxu0 %v209
    %v310 = vpop.f32.mrf.mxu0
    %v311 = vadd.f32 %v140, %v310
    %v312 = vpop.f32.mrf.mxu0
    %v313 = vadd.f32 %v140, %v312
    %314 = vmatmul.bf16.gmra.mxu0 %v210
    %v315 = vpop.f32.mrf.mxu0
    %v316 = vadd.f32 %v140, %v315
    %v317 = vpop.f32.mrf.mxu0
    %v318 = vadd.f32 %v140, %v317
    %319 = vmatmul.bf16.gmra.mxu0 %v211
    %v320 = vpop.f32.mrf.mxu0
    %v321 = vadd.f32 %v140, %v320
    %v322 = vpop.f32.mrf.mxu0
    %v323 = vadd.f32 %v140, %v322
    %324 = vmatmul.bf16.gmra.mxu0 %v212
    %v325 = vpop.f32.mrf.mxu0
    %v326 = vadd.f32 %v140, %v325
    %v327 = vpop.f32.mrf.mxu0
    %v328 = vadd.f32 %v140, %v327
    %329 = vmatmul.bf16.gmra.mxu0 %v213
    %v330 = vpop.f32.mrf.mxu0
    %v331 = vadd.f32 %v140, %v330
    %v332 = vpop.f32.mrf.mxu0
    %v333 = vadd.f32 %v140, %v332
    %334 = vmatmul.bf16.gmra.mxu0 %v214
    %v335 = vpop.f32.mrf.mxu0
    %v336 = vadd.f32 %v140, %v335
    %v337 = vpop.f32.mrf.mxu0
    %v338 = vadd.f32 %v140, %v337
    %339 = vmatmul.bf16.gmra.mxu0 %v215
    %v340 = vpop.f32.mrf.mxu0
    %v341 = vadd.f32 %v140, %v340
    %v342 = vpop.f32.mrf.mxu0
    %v343 = vadd.f32 %v140, %v342
    %344 = vmatmul.bf16.gmra.mxu0 %v216
    %v345 = vpop.f32.mrf.mxu0
    %v346 = vadd.f32 %v140, %v345
    %v347 = vpop.f32.mrf.mxu0
    %v348 = vadd.f32 %v140, %v347
    %349 = vmatmul.bf16.gmra.mxu0 %v217
    %v350 = vpop.f32.mrf.mxu0
    %v351 = vadd.f32 %v140, %v350
    %v352 = vpop.f32.mrf.mxu0
    %v353 = vadd.f32 %v140, %v352
    %354 = vmatmul.bf16.gmra.mxu0 %v218
    %v355 = vpop.f32.mrf.mxu0
    %v356 = vadd.f32 %v140, %v355
    %v357 = vpop.f32.mrf.mxu0
    %v358 = vadd.f32 %v140, %v357
    %359 = vmatmul.bf16.gmra.mxu0 %v219
    %v360 = vpop.f32.mrf.mxu0
    %v361 = vadd.f32 %v140, %v360
    %v362 = vpop.f32.mrf.mxu0
    %v363 = vadd.f32 %v140, %v362
    %364 = vmatmul.bf16.gmra.mxu0 %v220
    %v365 = vpop.f32.mrf.mxu0
    %v366 = vadd.f32 %v140, %v365
    %v367 = vpop.f32.mrf.mxu0
    %v368 = vadd.f32 %v140, %v367
    %369 = vmatmul.bf16.gmra.mxu0 %v221
    %v370 = vpop.f32.mrf.mxu0
    %v371 = vadd.f32 %v140, %v370
    %v372 = vpop.f32.mrf.mxu0
    %v373 = vadd.f32 %v140, %v372
    %374 = vdwg.mxu0
    %v375 = vmax.f32 %v296, 0.0
    %v376 = vmax.f32 %v298, 0.0
    %v377 = vmax.f32 %v301, 0.0
    %v378 = vmax.f32 %v303, 0.0
    %v379 = vmax.f32 %v306, 0.0
    %v380 = vmax.f32 %v308, 0.0
    %v381 = vmax.f32 %v311, 0.0
    %v382 = vmax.f32 %v313, 0.0
    %v383 = vmax.f32 %v316, 0.0
    %v384 = vmax.f32 %v318, 0.0
    %v385 = vmax.f32 %v321, 0.0
    %v386 = vmax.f32 %v323, 0.0
    %v387 = vmax.f32 %v326, 0.0
    %v388 = vmax.f32 %v328, 0.0
    %v389 = vmax.f32 %v331, 0.0
    %v390 = vmax.f32 %v333, 0.0
    %v391 = vmax.f32 %v336, 0.0
    %v392 = vmax.f32 %v338, 0.0
    %v393 = vmax.f32 %v341, 0.0
    %v394 = vmax.f32 %v343, 0.0
    %v395 = vmax.f32 %v346, 0.0
    %v396 = vmax.f32 %v348, 0.0
    %v397 = vmax.f32 %v351, 0.0
    %v398 = vmax.f32 %v353, 0.0
    %v399 = vmax.f32 %v356, 0.0
    %v400 = vmax.f32 %v358, 0.0
    %v401 = vmax.f32 %v361, 0.0
    %v402 = vmax.f32 %v363, 0.0
    %v403 = vmax.f32 %v366, 0.0
    %v404 = vmax.f32 %v368, 0.0
    %v405 = vmax.f32 %v371, 0.0
    %v406 = vmax.f32 %v373, 0.0
    %v407 = vpack.c.bf16 %v376, %v375
    %v408 = vpack.c.bf16 %v378, %v377
    %v409 = vpack.c.bf16 %v380, %v379
    %v410 = vpack.c.bf16 %v382, %v381
    %v411 = vpack.c.bf16 %v384, %v383
    %v412 = vpack.c.bf16 %v386, %v385
    %v413 = vpack.c.bf16 %v388, %v387
    %v414 = vpack.c.bf16 %v390, %v389
    %v415 = vpack.c.bf16 %v392, %v391
    %v416 = vpack.c.bf16 %v394, %v393
    %v417 = vpack.c.bf16 %v396, %v395
    %v418 = vpack.c.bf16 %v398, %v397
    %v419 = vpack.c.bf16 %v400, %v399
    %v420 = vpack.c.bf16 %v402, %v401
    %v421 = vpack.c.bf16 %v404, %v403
    %v422 = vpack.c.bf16 %v406, %v405
    %v423 = vld [vmem:[#allocation7] sm:$0xf]
    %v424 = vld [vmem:[#allocation7 + $0x4] sm:$0xf]
    %v425 = vld [vmem:[#allocation7 + $0x8] sm:$0xf]
    %v426 = vld [vmem:[#allocation7 + $0xc] sm:$0xf]
    %v427 = vld [vmem:[#allocation7 + $0x10] sm:$0xf]
    %v428 = vld [vmem:[#allocation7 + $0x14] sm:$0xf]
    %v429 = vld [vmem:[#allocation7 + $0x18] sm:$0xf]
    %v430 = vld [vmem:[#allocation7 + $0x1c] sm:$0xf]
    %v431 = vld [vmem:[#allocation7 + $0x20] sm:$0xf]
    %v432 = vld [vmem:[#allocation7 + $0x24] sm:$0xf]
    %v433 = vld [vmem:[#allocation7 + $0x28] sm:$0xf]
    %v434 = vld [vmem:[#allocation7 + $0x2c] sm:$0xf]
    %v435 = vld [vmem:[#allocation7 + $0x30] sm:$0xf]
    %v436 = vld [vmem:[#allocation7 + $0x34] sm:$0xf]
    %v437 = vld [vmem:[#allocation7 + $0x38] sm:$0xf]
    %v438 = vld [vmem:[#allocation7 + $0x3c] sm:$0xf]
    %v439 = vld [vmem:[%s4] sm:$0x1]
    %v441 = vperm.slane %v439, 0
    %v459 = vunpack.c.l.b16 %v423
    %v460 = vunpack.c.l.b16 %v424
    %v461 = vunpack.c.l.b16 %v425
    %v462 = vunpack.c.l.b16 %v426
    %v463 = vunpack.c.l.b16 %v427
    %v464 = vunpack.c.l.b16 %v428
    %v465 = vunpack.c.l.b16 %v429
    %v466 = vunpack.c.l.b16 %v430
    %v467 = vunpack.c.l.b16 %v431
    %v468 = vunpack.c.l.b16 %v432
    %v469 = vunpack.c.l.b16 %v433
    %v470 = vunpack.c.l.b16 %v434
    %v471 = vunpack.c.l.b16 %v435
    %v472 = vunpack.c.l.b16 %v436
    %v473 = vunpack.c.l.b16 %v437
    %v474 = vunpack.c.l.b16 %v438
    %v475 = vpack.c.b16 %v460, %v459
    %v476 = vpack.c.b16 %v462, %v461
    %v477 = vpack.c.b16 %v464, %v463
    %v478 = vpack.c.b16 %v466, %v465
    %v479 = vpack.c.b16 %v468, %v467
    %v480 = vpack.c.b16 %v470, %v469
    %v481 = vpack.c.b16 %v472, %v471
    %v482 = vpack.c.b16 %v474, %v473
    %491 = vmatpush.bf16.msra.mxu0 %v482
    %492 = vmatpush.bf16.msra.mxu0 %v481
    %493 = vmatpush.bf16.msra.mxu0 %v480
    %494 = vmatpush.bf16.msra.mxu0 %v479
    %495 = vmatpush.bf16.msra.mxu0 %v478
    %496 = vmatpush.bf16.msra.mxu0 %v477
    %497 = vmatpush.bf16.msra.mxu0 %v476
    %498 = vmatpush.bf16.msra.mxu0 %v475
    %499 = vmatmul.bf16.gmra.mxu0 %v407
    %v500 = vpop.f32.mrf.mxu0
    %v501 = vadd.f32 %v441, %v500
    %v502 = vpop.f32.mrf.mxu0
    %v503 = vadd.f32 %v441, %v502
    %504 = vmatmul.bf16.gmra.mxu0 %v408
    %v505 = vpop.f32.mrf.mxu0
    %v506 = vadd.f32 %v441, %v505
    %v507 = vpop.f32.mrf.mxu0
    %v508 = vadd.f32 %v441, %v507
    %509 = vmatmul.bf16.gmra.mxu0 %v409
    %v510 = vpop.f32.mrf.mxu0
    %v511 = vadd.f32 %v441, %v510
    %v512 = vpop.f32.mrf.mxu0
    %v513 = vadd.f32 %v441, %v512
    %514 = vmatmul.bf16.gmra.mxu0 %v410
    %v515 = vpop.f32.mrf.mxu0
    %v516 = vadd.f32 %v441, %v515
    %v517 = vpop.f32.mrf.mxu0
    %v518 = vadd.f32 %v441, %v517
    %519 = vmatmul.bf16.gmra.mxu0 %v411
    %v520 = vpop.f32.mrf.mxu0
    %v521 = vadd.f32 %v441, %v520
    %v522 = vpop.f32.mrf.mxu0
    %v523 = vadd.f32 %v441, %v522
    %524 = vmatmul.bf16.gmra.mxu0 %v412
    %v525 = vpop.f32.mrf.mxu0
    %v526 = vadd.f32 %v441, %v525
    %v527 = vpop.f32.mrf.mxu0
    %v528 = vadd.f32 %v441, %v527
    %529 = vmatmul.bf16.gmra.mxu0 %v413
    %v530 = vpop.f32.mrf.mxu0
    %v531 = vadd.f32 %v441, %v530
    %v532 = vpop.f32.mrf.mxu0
    %v533 = vadd.f32 %v441, %v532
    %534 = vmatmul.bf16.gmra.mxu0 %v414
    %v535 = vpop.f32.mrf.mxu0
    %v536 = vadd.f32 %v441, %v535
    %v537 = vpop.f32.mrf.mxu0
    %v538 = vadd.f32 %v441, %v537
    %539 = vmatmul.bf16.gmra.mxu0 %v415
    %v540 = vpop.f32.mrf.mxu0
    %v541 = vadd.f32 %v441, %v540
    %v542 = vpop.f32.mrf.mxu0
    %v543 = vadd.f32 %v441, %v542
    %544 = vmatmul.bf16.gmra.mxu0 %v416
    %v545 = vpop.f32.mrf.mxu0
    %v546 = vadd.f32 %v441, %v545
    %v547 = vpop.f32.mrf.mxu0
    %v548 = vadd.f32 %v441, %v547
    %549 = vmatmul.bf16.gmra.mxu0 %v417
    %v550 = vpop.f32.mrf.mxu0
    %v551 = vadd.f32 %v441, %v550
    %v552 = vpop.f32.mrf.mxu0
    %v553 = vadd.f32 %v441, %v552
    %554 = vmatmul.bf16.gmra.mxu0 %v418
    %v555 = vpop.f32.mrf.mxu0
    %v556 = vadd.f32 %v441, %v555
    %v557 = vpop.f32.mrf.mxu0
    %v558 = vadd.f32 %v441, %v557
    %559 = vmatmul.bf16.gmra.mxu0 %v419
    %v560 = vpop.f32.mrf.mxu0
    %v561 = vadd.f32 %v441, %v560
    %v562 = vpop.f32.mrf.mxu0
    %v563 = vadd.f32 %v441, %v562
    %564 = vmatmul.bf16.gmra.mxu0 %v420
    %v565 = vpop.f32.mrf.mxu0
    %v566 = vadd.f32 %v441, %v565
    %v567 = vpop.f32.mrf.mxu0
    %v568 = vadd.f32 %v441, %v567
    %569 = vmatmul.bf16.gmra.mxu0 %v421
    %v570 = vpop.f32.mrf.mxu0
    %v571 = vadd.f32 %v441, %v570
    %v572 = vpop.f32.mrf.mxu0
    %v573 = vadd.f32 %v441, %v572
    %574 = vmatmul.bf16.gmra.mxu0 %v422
    %v575 = vpop.f32.mrf.mxu0
    %v576 = vadd.f32 %v441, %v575
    %v577 = vpop.f32.mrf.mxu0
    %v578 = vadd.f32 %v441, %v577
    %579 = vdwg.mxu0
    %v580 = vmax.f32 %v501, 0.0
    %v581 = vmax.f32 %v503, 0.0
    %v582 = vmax.f32 %v506, 0.0
    %v583 = vmax.f32 %v508, 0.0
    %v584 = vmax.f32 %v511, 0.0
    %v585 = vmax.f32 %v513, 0.0
    %v586 = vmax.f32 %v516, 0.0
    %v587 = vmax.f32 %v518, 0.0
    %v588 = vmax.f32 %v521, 0.0
    %v589 = vmax.f32 %v523, 0.0
    %v590 = vmax.f32 %v526, 0.0
    %v591 = vmax.f32 %v528, 0.0
    %v592 = vmax.f32 %v531, 0.0
    %v593 = vmax.f32 %v533, 0.0
    %v594 = vmax.f32 %v536, 0.0
    %v595 = vmax.f32 %v538, 0.0
    %v596 = vmax.f32 %v541, 0.0
    %v597 = vmax.f32 %v543, 0.0
    %v598 = vmax.f32 %v546, 0.0
    %v599 = vmax.f32 %v548, 0.0
    %v600 = vmax.f32 %v551, 0.0
    %v601 = vmax.f32 %v553, 0.0
    %v602 = vmax.f32 %v556, 0.0
    %v603 = vmax.f32 %v558, 0.0
    %v604 = vmax.f32 %v561, 0.0
    %v605 = vmax.f32 %v563, 0.0
    %v606 = vmax.f32 %v566, 0.0
    %v607 = vmax.f32 %v568, 0.0
    %v608 = vmax.f32 %v571, 0.0
    %v609 = vmax.f32 %v573, 0.0
    %v610 = vmax.f32 %v576, 0.0
    %v611 = vmax.f32 %v578, 0.0
    %v612 = vpack.c.bf16 %v581, %v580
    %v613 = vpack.c.bf16 %v583, %v582
    %v614 = vpack.c.bf16 %v585, %v584
    %v615 = vpack.c.bf16 %v587, %v586
    %v616 = vpack.c.bf16 %v589, %v588
    %v617 = vpack.c.bf16 %v591, %v590
    %v618 = vpack.c.bf16 %v593, %v592
    %v619 = vpack.c.bf16 %v595, %v594
    %v620 = vpack.c.bf16 %v597, %v596
    %v621 = vpack.c.bf16 %v599, %v598
    %v622 = vpack.c.bf16 %v601, %v600
    %v623 = vpack.c.bf16 %v603, %v602
    %v624 = vpack.c.bf16 %v605, %v604
    %v625 = vpack.c.bf16 %v607, %v606
    %v626 = vpack.c.bf16 %v609, %v608
    %v627 = vpack.c.bf16 %v611, %v610
    %628 = vmatpush.bf16.msra.mxu0 %v482
    %629 = vmatpush.bf16.msra.mxu0 %v481
    %630 = vmatpush.bf16.msra.mxu0 %v480
    %631 = vmatpush.bf16.msra.mxu0 %v479
    %632 = vmatpush.bf16.msra.mxu0 %v478
    %633 = vmatpush.bf16.msra.mxu0 %v477
    %634 = vmatpush.bf16.msra.mxu0 %v476
    %635 = vmatpush.bf16.msra.mxu0 %v475
    %636 = vmatmul.bf16.gmra.mxu0 %v612
    %v637 = vpop.f32.mrf.mxu0
    %v638 = vadd.f32 %v441, %v637
    %v639 = vpop.f32.mrf.mxu0
    %v640 = vadd.f32 %v441, %v639
    %641 = vmatmul.bf16.gmra.mxu0 %v613
    %v642 = vpop.f32.mrf.mxu0
    %v643 = vadd.f32 %v441, %v642
    %v644 = vpop.f32.mrf.mxu0
    %v645 = vadd.f32 %v441, %v644
    %646 = vmatmul.bf16.gmra.mxu0 %v614
    %v647 = vpop.f32.mrf.mxu0
    %v648 = vadd.f32 %v441, %v647
    %v649 = vpop.f32.mrf.mxu0
    %v650 = vadd.f32 %v441, %v649
    %651 = vmatmul.bf16.gmra.mxu0 %v615
    %v652 = vpop.f32.mrf.mxu0
    %v653 = vadd.f32 %v441, %v652
    %v654 = vpop.f32.mrf.mxu0
    %v655 = vadd.f32 %v441, %v654
    %656 = vmatmul.bf16.gmra.mxu0 %v616
    %v657 = vpop.f32.mrf.mxu0
    %v658 = vadd.f32 %v441, %v657
    %v659 = vpop.f32.mrf.mxu0
    %v660 = vadd.f32 %v441, %v659
    %661 = vmatmul.bf16.gmra.mxu0 %v617
    %v662 = vpop.f32.mrf.mxu0
    %v663 = vadd.f32 %v441, %v662
    %v664 = vpop.f32.mrf.mxu0
    %v665 = vadd.f32 %v441, %v664
    %666 = vmatmul.bf16.gmra.mxu0 %v618
    %v667 = vpop.f32.mrf.mxu0
    %v668 = vadd.f32 %v441, %v667
    %v669 = vpop.f32.mrf.mxu0
    %v670 = vadd.f32 %v441, %v669
    %671 = vmatmul.bf16.gmra.mxu0 %v619
    %v672 = vpop.f32.mrf.mxu0
    %v673 = vadd.f32 %v441, %v672
    %v674 = vpop.f32.mrf.mxu0
    %v675 = vadd.f32 %v441, %v674
    %676 = vmatmul.bf16.gmra.mxu0 %v620
    %v677 = vpop.f32.mrf.mxu0
    %v678 = vadd.f32 %v441, %v677
    %v679 = vpop.f32.mrf.mxu0
    %v680 = vadd.f32 %v441, %v679
    %681 = vmatmul.bf16.gmra.mxu0 %v621
    %v682 = vpop.f32.mrf.mxu0
    %v683 = vadd.f32 %v441, %v682
    %v684 = vpop.f32.mrf.mxu0
    %v685 = vadd.f32 %v441, %v684
    %686 = vmatmul.bf16.gmra.mxu0 %v622
    %v687 = vpop.f32.mrf.mxu0
    %v688 = vadd.f32 %v441, %v687
    %v689 = vpop.f32.mrf.mxu0
    %v690 = vadd.f32 %v441, %v689
    %691 = vmatmul.bf16.gmra.mxu0 %v623
    %v692 = vpop.f32.mrf.mxu0
    %v693 = vadd.f32 %v441, %v692
    %v694 = vpop.f32.mrf.mxu0
    %v695 = vadd.f32 %v441, %v694
    %696 = vmatmul.bf16.gmra.mxu0 %v624
    %v697 = vpop.f32.mrf.mxu0
    %v698 = vadd.f32 %v441, %v697
    %v699 = vpop.f32.mrf.mxu0
    %v700 = vadd.f32 %v441, %v699
    %701 = vmatmul.bf16.gmra.mxu0 %v625
    %v702 = vpop.f32.mrf.mxu0
    %v703 = vadd.f32 %v441, %v702
    %v704 = vpop.f32.mrf.mxu0
    %v705 = vadd.f32 %v441, %v704
    %706 = vmatmul.bf16.gmra.mxu0 %v626
    %v707 = vpop.f32.mrf.mxu0
    %v708 = vadd.f32 %v441, %v707
    %v709 = vpop.f32.mrf.mxu0
    %v710 = vadd.f32 %v441, %v709
    %711 = vmatmul.bf16.gmra.mxu0 %v627
    %v712 = vpop.f32.mrf.mxu0
    %v713 = vadd.f32 %v441, %v712
    %v714 = vpop.f32.mrf.mxu0
    %v715 = vadd.f32 %v441, %v714
    %716 = vdwg.mxu0
    %v717 = vmax.f32 %v638, 0.0
    %v718 = vmax.f32 %v640, 0.0
    %v719 = vmax.f32 %v643, 0.0
    %v720 = vmax.f32 %v645, 0.0
    %v721 = vmax.f32 %v648, 0.0
    %v722 = vmax.f32 %v650, 0.0
    %v723 = vmax.f32 %v653, 0.0
    %v724 = vmax.f32 %v655, 0.0
    %v725 = vmax.f32 %v658, 0.0
    %v726 = vmax.f32 %v660, 0.0
    %v727 = vmax.f32 %v663, 0.0
    %v728 = vmax.f32 %v665, 0.0
    %v729 = vmax.f32 %v668, 0.0
    %v730 = vmax.f32 %v670, 0.0
    %v731 = vmax.f32 %v673, 0.0
    %v732 = vmax.f32 %v675, 0.0
    %v733 = vmax.f32 %v678, 0.0
    %v734 = vmax.f32 %v680, 0.0
    %v735 = vmax.f32 %v683, 0.0
    %v736 = vmax.f32 %v685, 0.0
    %v737 = vmax.f32 %v688, 0.0
    %v738 = vmax.f32 %v690, 0.0
    %v739 = vmax.f32 %v693, 0.0
    %v740 = vmax.f32 %v695, 0.0
    %v741 = vmax.f32 %v698, 0.0
    %v742 = vmax.f32 %v700, 0.0
    %v743 = vmax.f32 %v703, 0.0
    %v744 = vmax.f32 %v705, 0.0
    %v745 = vmax.f32 %v708, 0.0
    %v746 = vmax.f32 %v710, 0.0
    %v747 = vmax.f32 %v713, 0.0
    %v748 = vmax.f32 %v715, 0.0
    %v749 = vpack.c.bf16 %v718, %v717
    %v750 = vpack.c.bf16 %v720, %v719
    %v751 = vpack.c.bf16 %v722, %v721
    %v752 = vpack.c.bf16 %v724, %v723
    %v753 = vpack.c.bf16 %v726, %v725
    %v754 = vpack.c.bf16 %v728, %v727
    %v755 = vpack.c.bf16 %v730, %v729
    %v756 = vpack.c.bf16 %v732, %v731
    %v757 = vpack.c.bf16 %v734, %v733
    %v758 = vpack.c.bf16 %v736, %v735
    %v759 = vpack.c.bf16 %v738, %v737
    %v760 = vpack.c.bf16 %v740, %v739
    %v761 = vpack.c.bf16 %v742, %v741
    %v762 = vpack.c.bf16 %v744, %v743
    %v763 = vpack.c.bf16 %v746, %v745
    %v764 = vpack.c.bf16 %v748, %v747
    %v765 = vld [vmem:[#allocation8] sm:$0xf]
    %v766 = vld [vmem:[#allocation8 + $0x4] sm:$0xf]
    %v767 = vld [vmem:[#allocation8 + $0x8] sm:$0xf]
    %v768 = vld [vmem:[#allocation8 + $0xc] sm:$0xf]
    %v769 = vld [vmem:[#allocation8 + $0x10] sm:$0xf]
    %v770 = vld [vmem:[#allocation8 + $0x14] sm:$0xf]
    %v771 = vld [vmem:[#allocation8 + $0x18] sm:$0xf]
    %v772 = vld [vmem:[#allocation8 + $0x1c] sm:$0xf]
    %v773 = vld [vmem:[#allocation8 + $0x20] sm:$0xf]
    %v774 = vld [vmem:[#allocation8 + $0x24] sm:$0xf]
    %v775 = vld [vmem:[#allocation8 + $0x28] sm:$0xf]
    %v776 = vld [vmem:[#allocation8 + $0x2c] sm:$0xf]
    %v777 = vld [vmem:[#allocation8 + $0x30] sm:$0xf]
    %v778 = vld [vmem:[#allocation8 + $0x34] sm:$0xf]
    %v779 = vld [vmem:[#allocation8 + $0x38] sm:$0xf]
    %v780 = vld [vmem:[#allocation8 + $0x3c] sm:$0xf]
    %v781 = vld [vmem:[%s6] sm:$0x1]
    %v783 = vperm.slane %v781, 0
    %v801 = vunpack.c.l.b16 %v765
    %v802 = vunpack.c.l.b16 %v766
    %v803 = vunpack.c.l.b16 %v767
    %v804 = vunpack.c.l.b16 %v768
    %v805 = vunpack.c.l.b16 %v769
    %v806 = vunpack.c.l.b16 %v770
    %v807 = vunpack.c.l.b16 %v771
    %v808 = vunpack.c.l.b16 %v772
    %v809 = vunpack.c.l.b16 %v773
    %v810 = vunpack.c.l.b16 %v774
    %v811 = vunpack.c.l.b16 %v775
    %v812 = vunpack.c.l.b16 %v776
    %v813 = vunpack.c.l.b16 %v777
    %v814 = vunpack.c.l.b16 %v778
    %v815 = vunpack.c.l.b16 %v779
    %v816 = vunpack.c.l.b16 %v780
    %v817 = vpack.c.b16 %v802, %v801
    %v818 = vpack.c.b16 %v804, %v803
    %v819 = vpack.c.b16 %v806, %v805
    %v820 = vpack.c.b16 %v808, %v807
    %v821 = vpack.c.b16 %v810, %v809
    %v822 = vpack.c.b16 %v812, %v811
    %v823 = vpack.c.b16 %v814, %v813
    %v824 = vpack.c.b16 %v816, %v815
    %833 = vmatpush.bf16.msra.mxu0 %v824
    %834 = vmatpush.bf16.msra.mxu0 %v823
    %835 = vmatpush.bf16.msra.mxu0 %v822
    %836 = vmatpush.bf16.msra.mxu0 %v821
    %837 = vmatpush.bf16.msra.mxu0 %v820
    %838 = vmatpush.bf16.msra.mxu0 %v819
    %839 = vmatpush.bf16.msra.mxu0 %v818
    %840 = vmatpush.bf16.msra.mxu0 %v817
    %841 = vmatmul.bf16.gmra.mxu0 %v749
    %v842 = vpop.f32.mrf.mxu0
    %v843 = vadd.f32 %v783, %v842
    %v844 = vpop.f32.mrf.mxu0
    %v845 = vadd.f32 %v783, %v844
    %846 = vmatmul.bf16.gmra.mxu0 %v750
    %v847 = vpop.f32.mrf.mxu0
    %v848 = vadd.f32 %v783, %v847
    %v849 = vpop.f32.mrf.mxu0
    %v850 = vadd.f32 %v783, %v849
    %851 = vmatmul.bf16.gmra.mxu0 %v751
    %v852 = vpop.f32.mrf.mxu0
    %v853 = vadd.f32 %v783, %v852
    %v854 = vpop.f32.mrf.mxu0
    %v855 = vadd.f32 %v783, %v854
    %856 = vmatmul.bf16.gmra.mxu0 %v752
    %v857 = vpop.f32.mrf.mxu0
    %v858 = vadd.f32 %v783, %v857
    %v859 = vpop.f32.mrf.mxu0
    %v860 = vadd.f32 %v783, %v859
    %861 = vmatmul.bf16.gmra.mxu0 %v753
    %v862 = vpop.f32.mrf.mxu0
    %v863 = vadd.f32 %v783, %v862
    %v864 = vpop.f32.mrf.mxu0
    %v865 = vadd.f32 %v783, %v864
    %866 = vmatmul.bf16.gmra.mxu0 %v754
    %v867 = vpop.f32.mrf.mxu0
    %v868 = vadd.f32 %v783, %v867
    %v869 = vpop.f32.mrf.mxu0
    %v870 = vadd.f32 %v783, %v869
    %871 = vmatmul.bf16.gmra.mxu0 %v755
    %v872 = vpop.f32.mrf.mxu0
    %v873 = vadd.f32 %v783, %v872
    %v874 = vpop.f32.mrf.mxu0
    %v875 = vadd.f32 %v783, %v874
    %876 = vmatmul.bf16.gmra.mxu0 %v756
    %v877 = vpop.f32.mrf.mxu0
    %v878 = vadd.f32 %v783, %v877
    %v879 = vpop.f32.mrf.mxu0
    %v880 = vadd.f32 %v783, %v879
    %881 = vmatmul.bf16.gmra.mxu0 %v757
    %v882 = vpop.f32.mrf.mxu0
    %v883 = vadd.f32 %v783, %v882
    %v884 = vpop.f32.mrf.mxu0
    %v885 = vadd.f32 %v783, %v884
    %886 = vmatmul.bf16.gmra.mxu0 %v758
    %v887 = vpop.f32.mrf.mxu0
    %v888 = vadd.f32 %v783, %v887
    %v889 = vpop.f32.mrf.mxu0
    %v890 = vadd.f32 %v783, %v889
    %891 = vmatmul.bf16.gmra.mxu0 %v759
    %v892 = vpop.f32.mrf.mxu0
    %v893 = vadd.f32 %v783, %v892
    %v894 = vpop.f32.mrf.mxu0
    %v895 = vadd.f32 %v783, %v894
    %896 = vmatmul.bf16.gmra.mxu0 %v760
    %v897 = vpop.f32.mrf.mxu0
    %v898 = vadd.f32 %v783, %v897
    %v899 = vpop.f32.mrf.mxu0
    %v900 = vadd.f32 %v783, %v899
    %901 = vmatmul.bf16.gmra.mxu0 %v761
    %v902 = vpop.f32.mrf.mxu0
    %v903 = vadd.f32 %v783, %v902
    %v904 = vpop.f32.mrf.mxu0
    %v905 = vadd.f32 %v783, %v904
    %906 = vmatmul.bf16.gmra.mxu0 %v762
    %v907 = vpop.f32.mrf.mxu0
    %v908 = vadd.f32 %v783, %v907
    %v909 = vpop.f32.mrf.mxu0
    %v910 = vadd.f32 %v783, %v909
    %911 = vmatmul.bf16.gmra.mxu0 %v763
    %v912 = vpop.f32.mrf.mxu0
    %v913 = vadd.f32 %v783, %v912
    %v914 = vpop.f32.mrf.mxu0
    %v915 = vadd.f32 %v783, %v914
    %916 = vmatmul.bf16.gmra.mxu0 %v764
    %v917 = vpop.f32.mrf.mxu0
    %v918 = vadd.f32 %v783, %v917
    %v919 = vpop.f32.mrf.mxu0
    %v920 = vadd.f32 %v783, %v919
    %921 = vdwg.mxu0
    %922 = vst [vmem:[#allocation10] sm:$0xff] %v843
    %923 = vst [vmem:[#allocation10 + $0x8] sm:$0xff] %v845
    %924 = vst [vmem:[#allocation10 + $0x10] sm:$0xff] %v848
    %925 = vst [vmem:[#allocation10 + $0x18] sm:$0xff] %v850
    %926 = vst [vmem:[#allocation10 + $0x20] sm:$0xff] %v853
    %927 = vst [vmem:[#allocation10 + $0x28] sm:$0xff] %v855
    %928 = vst [vmem:[#allocation10 + $0x30] sm:$0xff] %v858
    %929 = vst [vmem:[#allocation10 + $0x38] sm:$0xff] %v860
    %930 = vst [vmem:[#allocation10 + $0x40] sm:$0xff] %v863
    %931 = vst [vmem:[#allocation10 + $0x48] sm:$0xff] %v865
    %932 = vst [vmem:[#allocation10 + $0x50] sm:$0xff] %v868
    %933 = vst [vmem:[#allocation10 + $0x58] sm:$0xff] %v870
    %934 = vst [vmem:[#allocation10 + $0x60] sm:$0xff] %v873
    %935 = vst [vmem:[#allocation10 + $0x68] sm:$0xff] %v875
    %936 = vst [vmem:[#allocation10 + $0x70] sm:$0xff] %v878
    %937 = vst [vmem:[#allocation10 + $0x78] sm:$0xff] %v880
    %938 = vst [vmem:[#allocation10 + $0x80] sm:$0xff] %v883
    %939 = vst [vmem:[#allocation10 + $0x88] sm:$0xff] %v885
    %940 = vst [vmem:[#allocation10 + $0x90] sm:$0xff] %v888
    %941 = vst [vmem:[#allocation10 + $0x98] sm:$0xff] %v890
    %942 = vst [vmem:[#allocation10 + $0xa0] sm:$0xff] %v893
    %943 = vst [vmem:[#allocation10 + $0xa8] sm:$0xff] %v895
    %944 = vst [vmem:[#allocation10 + $0xb0] sm:$0xff] %v898
    %945 = vst [vmem:[#allocation10 + $0xb8] sm:$0xff] %v900
    %946 = vst [vmem:[#allocation10 + $0xc0] sm:$0xff] %v903
    %947 = vst [vmem:[#allocation10 + $0xc8] sm:$0xff] %v905
    %948 = vst [vmem:[#allocation10 + $0xd0] sm:$0xff] %v908
    %949 = vst [vmem:[#allocation10 + $0xd8] sm:$0xff] %v910
    %950 = vst [vmem:[#allocation10 + $0xe0] sm:$0xff] %v913
    %951 = vst [vmem:[#allocation10 + $0xe8] sm:$0xff] %v915
    %952 = vst [vmem:[#allocation10 + $0xf0] sm:$0xff] %v918
    %953 = vst [vmem:[#allocation10 + $0xf8] sm:$0xff] %v920
    // Predicated region
    $region46: #{tpu_custom_call.1} parent=1 // pred_check
      _
    $region47: #{tpu_custom_call.1} parent=1 // pred_check_branch
      %955 = sbr.rel (0) target = $region49
    $region48: #{tpu_custom_call.1} parent=1 // pred_region
      %957 = vsyncadd [#allocation4], 0
      %s958 = sshll.u32 [#allocation10], 4
      %s959 = int_to_ptr.vmem [resolvable:$true] %s958
      %s960 = sshll.u32 %s7, 4
      %s961 = int_to_ptr.hbm [resolvable:$true] %s960
      %966 = dma.vmem_to_hbm [thread:$0]  %s959, 4096, %s961, [#allocation4], 128, 128, 8
    $region49: #{tpu_custom_call.1} parent=1 // pred_fallthru
      _
    // Predicated region
    $region50: #{tpu_custom_call.1} parent=1 // pred_check
      _
    $region51: #{tpu_custom_call.1} parent=1 // pred_check_branch
      %968 = sbr.rel (0) target = $region53
    $region52: #{tpu_custom_call.1} parent=1 // pred_region
      %970 = dma.done [#allocation4], 4096
    $region53: #{tpu_custom_call.1} parent=1 // pred_fallthru
      _
    %971 = vsyncpa [#allocation3], 1
    %972 = vsyncpa [#allocation6], 1
    %973 = vsyncpa [#allocation9], 1
    %974 = vsyncpa [#allocation4], 1

</llo_original>
